<compile_context>
chip_gen: v6e
topology: v6e:2x2x1
jax: 0.10.0
libtpu: 0.0.40
codegen_flags: <defaults>
</compile_context>

<pallas_src>
import jax
import jax.numpy as jnp
from jax.experimental import pallas as pl
from jax.experimental.pallas import tpu as pltpu

LEN_FEATURE_S = 1024
LEN_FEATURE_B = 128
H1 = 512
H2 = 256

RRELU_SLOPE = (1.0 / 8.0 + 1.0 / 3.0) / 2.0  # eval-mode RReLU negative slope


def _rrelu(x):
    # f32 on the VPU (matmul outputs are f32 via preferred_element_type).
    return jnp.where(x >= 0, x, RRELU_SLOPE * x)


def _round_up(n, m):
    return ((n + m - 1) // m) * m


def _cdiv(a, b):
    return -(-a // b)


def mlp_kernel(x_ref, w1_ref, b1_ref, w2_ref, b2_ref, w3_ref, b3_ref, o_ref):
    # x arrives f32; cast to bf16 per tile in-kernel (cheap VPU work) so the
    # wrapper never does a separate f32->bf16 HBM round trip on x.
    x = x_ref[...].astype(jnp.bfloat16)
    h1 = jnp.dot(x, w1_ref[...], preferred_element_type=jnp.float32) + b1_ref[...]
    h1 = _rrelu(h1)
    h2 = jnp.dot(h1.astype(jnp.bfloat16), w2_ref[...],
                 preferred_element_type=jnp.float32) + b2_ref[...]
    h2 = _rrelu(h2)
    out = jnp.dot(h2.astype(jnp.bfloat16), w3_ref[...],
                  preferred_element_type=jnp.float32) + b3_ref[...]
    o_ref[...] = out.astype(o_ref.dtype)


def _choose_tile_b(B, target_tile_b, min_grid_steps):
    """Balanced, 16-aligned row tile: avoids pathological padding and lets the
    caller force >=2 grid steps (v7x megacore)."""
    target = max(16, _round_up(target_tile_b, 16))
    n_steps = max(min_grid_steps, _cdiv(B, target))
    tile = _round_up(_cdiv(B, n_steps), 16)
    return max(16, min(tile, target))


def prepare_params(params):
    """One-time conversion: weight matrices -> bf16 (MXU operands); biases stay f32.
    Do this at init / checkpoint-load time, not per forward call."""
    w1, b1, w2, b2, w3, b3 = params
    return (w1.astype(jnp.bfloat16), b1,
            w2.astype(jnp.bfloat16), b2,
            w3.astype(jnp.bfloat16), b3)


def sentence_module_forward(x, params, *, target_tile_b=256, min_grid_steps=1):
    """x: [B, 1024] f32 -> [B, 128] f32.

    target_tile_b=256 is a good default on v5e/v6e (keeps f32 intermediates
    small while filling the MXU M dimension); on v7x pass min_grid_steps=2 so
    both TensorCores get a batch shard. Batch is padded to a tile multiple and
    sliced back afterwards.
    """
    w1, b1, w2, b2, w3, b3 = params
    B = x.shape[0]

    # Fallback only: params should already be bf16 via prepare_params.
    if w1.dtype != jnp.bfloat16:
        w1, w2, w3 = (w.astype(jnp.bfloat16) for w in (w1, w2, w3))

    tile_b = _choose_tile_b(B, target_tile_b, min_grid_steps)
    B_pad = _round_up(B, tile_b)
    if B_pad != B:
        x = jnp.pad(x, ((0, B_pad - B), (0, 0)))

    grid = (B_pad // tile_b,)
    resident = pl.Buffered(1)  # grid-invariant operands: single-buffered

    in_specs = [
        pl.BlockSpec((tile_b, LEN_FEATURE_S), lambda i: (i, 0)),              # x tile (f32)
        pl.BlockSpec((LEN_FEATURE_S, H1), lambda i: (0, 0), pipeline_mode=resident),  # w1 bf16
        pl.BlockSpec((1, H1), lambda i: (0, 0), pipeline_mode=resident),               # b1 f32
        pl.BlockSpec((H1, H2), lambda i: (0, 0), pipeline_mode=resident),              # w2 bf16
        pl.BlockSpec((1, H2), lambda i: (0, 0), pipeline_mode=resident),               # b2 f32
        pl.BlockSpec((H2, LEN_FEATURE_B), lambda i: (0, 0), pipeline_mode=resident),   # w3 bf16
        pl.BlockSpec((1, LEN_FEATURE_B), lambda i: (0, 0), pipeline_mode=resident),    # b3 f32
    ]
    out_spec = pl.BlockSpec((tile_b, LEN_FEATURE_B), lambda i: (i, 0))

    flops = 2 * B_pad * (LEN_FEATURE_S * H1 + H1 * H2 + H2 * LEN_FEATURE_B)
    bytes_accessed = (
        B_pad * LEN_FEATURE_S * x.dtype.itemsize                     # x (f32)
        + (LEN_FEATURE_S * H1 + H1 * H2 + H2 * LEN_FEATURE_B) * 2    # weights (bf16)
        + (H1 + H2 + LEN_FEATURE_B) * 4                              # biases (f32)
        + B_pad * LEN_FEATURE_B * 4                                  # output (f32)
    )

    out = pl.pallas_call(
        mlp_kernel,
        out_shape=jax.ShapeDtypeStruct((B_pad, LEN_FEATURE_B), jnp.float32),
        grid_spec=pltpu.PrefetchScalarGridSpec(
            num_scalar_prefetch=0,
            grid=grid,
            in_specs=in_specs,
            out_specs=out_spec,
        ),
        compiler_params=pltpu.CompilerParams(
            dimension_semantics=("parallel",),
        ),
        cost_estimate=pl.CostEstimate(
            flops=flops, transcendentals=0, bytes_accessed=bytes_accessed),
    )(x, w1, b1, w2, b2, w3, b3)

    return out[:B]


def init_params(key):
    """Deterministic init mirroring PyTorch nn.Linear defaults:
    U(-1/sqrt(fan_in), 1/sqrt(fan_in)) for weight and bias (f32)."""
    def linear(key, fan_in, fan_out):
        kw, kb = jax.random.split(key)
        bound = 1.0 / (fan_in ** 0.5)
        # stored as [in, out] (transposed vs PyTorch's [out, in])
        w = jax.random.uniform(kw, (fan_in, fan_out), jnp.float32, -bound, bound)
        b = jax.random.uniform(kb, (1, fan_out), jnp.float32, -bound, bound)
        return w, b

    k1, k2, k3 = jax.random.split(key, 3)
    w1, b1 = linear(k1, LEN_FEATURE_S, H1)
    w2, b2 = linear(k2, H1, H2)
    w3, b3 = linear(k3, H2, LEN_FEATURE_B)
    return (w1, b1, w2, b2, w3, b3)


def reference_forward(x, params):
    """Pure-JAX reference mirroring the kernel's bf16-matmul / f32-accumulate path."""
    w1, b1, w2, b2, w3, b3 = params
    bf = jnp.bfloat16
    h1 = _rrelu(jnp.dot(x.astype(bf), w1.astype(bf),
                        preferred_element_type=jnp.float32) + b1)
    h2 = _rrelu(jnp.dot(h1.astype(bf), w2.astype(bf),
                        preferred_element_type=jnp.float32) + b2)
    return jnp.dot(h2.astype(bf), w3.astype(bf),
                   preferred_element_type=jnp.float32) + b3


if __name__ == "__main__":
    key = jax.random.PRNGKey(0)
    kx, kp = jax.random.split(key)

    B = 8  # small demo batch; forward implies input [B, LEN_FEATURE_S]
    x = jax.random.normal(kx, (B, LEN_FEATURE_S), jnp.float32)
    params = prepare_params(init_params(kp))  # weights bf16 once, biases f32

    out = sentence_module_forward(x, params)
    out = jax.block_until_ready(out)

    ref = reference_forward(x, params)
    assert out.shape == (B, LEN_FEATURE_B)
    assert jnp.allclose(out, ref, atol=1e-2, rtol=1e-2)

    print("KERNEL_OK")
</pallas_src>

<mosaic_0001>
module attributes {stable_mosaic.version = 11 : i64} {
  func.func @mlp_kernel(%arg0: i32, %arg1: memref<16x1024xf32, #tpu.memory_space<vmem>>, %arg2: memref<1024x512xbf16, #tpu.memory_space<vmem>>, %arg3: memref<1x512xf32, #tpu.memory_space<vmem>>, %arg4: memref<512x256xbf16, #tpu.memory_space<vmem>>, %arg5: memref<1x256xf32, #tpu.memory_space<vmem>>, %arg6: memref<256x128xbf16, #tpu.memory_space<vmem>>, %arg7: memref<1x128xf32, #tpu.memory_space<vmem>>, %arg8: memref<16x128xf32, #tpu.memory_space<vmem>>) attributes {dimension_semantics = [#tpu.dimension_semantics<parallel>], iteration_bounds = array<i64: 1>, scalar_prefetch = 0 : i64, scratch_operands = 0 : i64, tpu.core_type = #tpu.core_type<tc>, window_params = [{transform_indices = @transform_0, window_bounds = array<i64: 16, 1024>}, {pipeline_mode = #tpu.pipeline_mode<synchronous>, transform_indices = @transform_1, window_bounds = array<i64: 1024, 512>}, {pipeline_mode = #tpu.pipeline_mode<synchronous>, transform_indices = @transform_2, window_bounds = array<i64: 1, 512>}, {pipeline_mode = #tpu.pipeline_mode<synchronous>, transform_indices = @transform_3, window_bounds = array<i64: 512, 256>}, {pipeline_mode = #tpu.pipeline_mode<synchronous>, transform_indices = @transform_4, window_bounds = array<i64: 1, 256>}, {pipeline_mode = #tpu.pipeline_mode<synchronous>, transform_indices = @transform_5, window_bounds = array<i64: 256, 128>}, {pipeline_mode = #tpu.pipeline_mode<synchronous>, transform_indices = @transform_6, window_bounds = array<i64: 1, 128>}, {transform_indices = @transform_7, window_bounds = array<i64: 16, 128>}]} {
    %c0 = arith.constant 0 : index
    %c0_0 = arith.constant 0 : index
    %0 = vector.load %arg1[%c0, %c0_0] : memref<16x1024xf32, #tpu.memory_space<vmem>>, vector<16x1024xf32>
    %1 = arith.truncf %0 : vector<16x1024xf32> to vector<16x1024xbf16>
    %c0_1 = arith.constant 0 : index
    %c0_2 = arith.constant 0 : index
    %2 = vector.load %arg2[%c0_1, %c0_2] : memref<1024x512xbf16, #tpu.memory_space<vmem>>, vector<1024x512xbf16>
    %cst = arith.constant dense<0.000000e+00> : vector<16x512xf32>
    %3 = tpu.matmul %1, %2, %cst {dimension_numbers = #tpu.dot_dimension_numbers<[1], [0], [0], [1], [0, 0, 1, 1], [], []>} : vector<16x1024xbf16>, vector<1024x512xbf16>, vector<16x512xf32> -> vector<16x512xf32>
    %c0_3 = arith.constant 0 : index
    %c0_4 = arith.constant 0 : index
    %4 = vector.load %arg3[%c0_3, %c0_4] : memref<1x512xf32, #tpu.memory_space<vmem>>, vector<1x512xf32>
    %5 = vector.broadcast %4 : vector<1x512xf32> to vector<16x512xf32>
    %6 = arith.addf %3, %5 : vector<16x512xf32>
    %cst_5 = arith.constant 0.000000e+00 : f32
    %7 = vector.broadcast %cst_5 : f32 to vector<16x512xf32>
    %8 = arith.cmpf oge, %6, %7 : vector<16x512xf32>
    %cst_6 = arith.constant 0.229166672 : f32
    %9 = vector.broadcast %cst_6 : f32 to vector<16x512xf32>
    %10 = arith.mulf %9, %6 : vector<16x512xf32>
    %11 = arith.select %8, %6, %10 : vector<16x512xi1>, vector<16x512xf32>
    %12 = arith.truncf %11 : vector<16x512xf32> to vector<16x512xbf16>
    %c0_7 = arith.constant 0 : index
    %c0_8 = arith.constant 0 : index
    %13 = vector.load %arg4[%c0_7, %c0_8] : memref<512x256xbf16, #tpu.memory_space<vmem>>, vector<512x256xbf16>
    %cst_9 = arith.constant dense<0.000000e+00> : vector<16x256xf32>
    %14 = tpu.matmul %12, %13, %cst_9 {dimension_numbers = #tpu.dot_dimension_numbers<[1], [0], [0], [1], [0, 0, 1, 1], [], []>} : vector<16x512xbf16>, vector<512x256xbf16>, vector<16x256xf32> -> vector<16x256xf32>
    %c0_10 = arith.constant 0 : index
    %c0_11 = arith.constant 0 : index
    %15 = vector.load %arg5[%c0_10, %c0_11] : memref<1x256xf32, #tpu.memory_space<vmem>>, vector<1x256xf32>
    %16 = vector.broadcast %15 : vector<1x256xf32> to vector<16x256xf32>
    %17 = arith.addf %14, %16 : vector<16x256xf32>
    %cst_12 = arith.constant 0.000000e+00 : f32
    %18 = vector.broadcast %cst_12 : f32 to vector<16x256xf32>
    %19 = arith.cmpf oge, %17, %18 : vector<16x256xf32>
    %cst_13 = arith.constant 0.229166672 : f32
    %20 = vector.broadcast %cst_13 : f32 to vector<16x256xf32>
    %21 = arith.mulf %20, %17 : vector<16x256xf32>
    %22 = arith.select %19, %17, %21 : vector<16x256xi1>, vector<16x256xf32>
    %23 = arith.truncf %22 : vector<16x256xf32> to vector<16x256xbf16>
    %c0_14 = arith.constant 0 : index
    %c0_15 = arith.constant 0 : index
    %24 = vector.load %arg6[%c0_14, %c0_15] : memref<256x128xbf16, #tpu.memory_space<vmem>>, vector<256x128xbf16>
    %cst_16 = arith.constant dense<0.000000e+00> : vector<16x128xf32>
    %25 = tpu.matmul %23, %24, %cst_16 {dimension_numbers = #tpu.dot_dimension_numbers<[1], [0], [0], [1], [0, 0, 1, 1], [], []>} : vector<16x256xbf16>, vector<256x128xbf16>, vector<16x128xf32> -> vector<16x128xf32>
    %c0_17 = arith.constant 0 : index
    %c0_18 = arith.constant 0 : index
    %26 = vector.load %arg7[%c0_17, %c0_18] : memref<1x128xf32, #tpu.memory_space<vmem>>, vector<1x128xf32>
    %27 = vector.broadcast %26 : vector<1x128xf32> to vector<16x128xf32>
    %28 = arith.addf %25, %27 : vector<16x128xf32>
    %c0_19 = arith.constant 0 : index
    %c0_20 = arith.constant 0 : index
    %29 = vector.load %arg8[%c0_19, %c0_20] : memref<16x128xf32, #tpu.memory_space<vmem>>, vector<16x128xf32>
    tpu.vector_store %arg8[%c0_19, %c0_20], %28 {strides = array<i32>} : memref<16x128xf32, #tpu.memory_space<vmem>>, vector<16x128xf32>,
    return
  }
  func.func @transform_0(%arg0: i32) -> (i32, i32) {
    %c0_i32 = arith.constant 0 : i32
    %c0_i32_0 = arith.constant 0 : i32
    return %arg0, %c0_i32 : i32, i32
  }
  func.func @transform_1(%arg0: i32) -> (i32, i32) {
    %c0_i32 = arith.constant 0 : i32
    %c0_i32_0 = arith.constant 0 : i32
    %c0_i32_1 = arith.constant 0 : i32
    return %c0_i32, %c0_i32_0 : i32, i32
  }
  func.func @transform_2(%arg0: i32) -> (i32, i32) {
    %c0_i32 = arith.constant 0 : i32
    %c0_i32_0 = arith.constant 0 : i32
    %c0_i32_1 = arith.constant 0 : i32
    return %c0_i32, %c0_i32_0 : i32, i32
  }
  func.func @transform_3(%arg0: i32) -> (i32, i32) {
    %c0_i32 = arith.constant 0 : i32
    %c0_i32_0 = arith.constant 0 : i32
    %c0_i32_1 = arith.constant 0 : i32
    return %c0_i32, %c0_i32_0 : i32, i32
  }
  func.func @transform_4(%arg0: i32) -> (i32, i32) {
    %c0_i32 = arith.constant 0 : i32
    %c0_i32_0 = arith.constant 0 : i32
    %c0_i32_1 = arith.constant 0 : i32
    return %c0_i32, %c0_i32_0 : i32, i32
  }
  func.func @transform_5(%arg0: i32) -> (i32, i32) {
    %c0_i32 = arith.constant 0 : i32
    %c0_i32_0 = arith.constant 0 : i32
    %c0_i32_1 = arith.constant 0 : i32
    return %c0_i32, %c0_i32_0 : i32, i32
  }
  func.func @transform_6(%arg0: i32) -> (i32, i32) {
    %c0_i32 = arith.constant 0 : i32
    %c0_i32_0 = arith.constant 0 : i32
    %c0_i32_1 = arith.constant 0 : i32
    return %c0_i32, %c0_i32_0 : i32, i32
  }
  func.func @transform_7(%arg0: i32) -> (i32, i32) {
    %c0_i32 = arith.constant 0 : i32
    %c0_i32_0 = arith.constant 0 : i32
    return %arg0, %c0_i32 : i32, i32
  }
}

</mosaic_0001>

<llo_original>
// kernel: tpu_custom_call.1
$region0: #{tpu_custom_call.1}
  #allocation0 [shape = 'u32[]', space=smem, size = 0x4, offset = 0x4, fixed_abs, tag = 'smem constant byte address 0x4 - core index']
  #allocation1 [shape = 'u32[144,128]{1,0:T(1,128)}', space=vmem, size = 0x12000, scoped, tag = 'internal scratch']
  %s0 = inlined_call_operand.hbm [shape: f32[16,1024], index: 0, kind: input, shape index: {}]
  %s1 = inlined_call_operand.hbm [shape: bf16[1024,512], index: 1, kind: input, shape index: {}]
  %s2 = inlined_call_operand.hbm [shape: f32[1,512], index: 2, kind: input, shape index: {}]
  %s3 = inlined_call_operand.hbm [shape: bf16[512,256], index: 3, kind: input, shape index: {}]
  %s4 = inlined_call_operand.vmem [shape: f32[1,256], index: 4, kind: input, shape index: {}]
  %s5 = inlined_call_operand.hbm [shape: bf16[256,128], index: 5, kind: input, shape index: {}]
  %s6 = inlined_call_operand.vmem [shape: f32[1,128], index: 6, kind: input, shape index: {}]
  %s7 = inlined_call_operand.hbm [shape: f32[16,128], index: 7, kind: output, shape index: {}]
  %s8 = sld [smem:[#allocation0]]
  $region58: #{tpu_custom_call.1} parent=0
    _
  %s10 = ssub.s32 1, %s8
  %s11 = scalar_select 0, %s10, %s8
  $region1: #{tpu_custom_call.1} parent=0
    #allocation2 [shape = 'u8[65536]{0}', space=vmem, size = 0x10000, scoped, tag = 'input window, operand 0, single buffered']
    #allocation3 [shape = 's32[1]{0}', space=sflag, size = 0x4, scoped, tag = 'scoped memory for tpu_custom_call.1']
    #allocation4 [shape = 's32[1]{0}', space=sflag, size = 0x4, scoped, tag = 'scoped memory for tpu_custom_call.1']
    #allocation5 [shape = 'u8[1048576]{0}', space=vmem, size = 0x100000, scoped, tag = 'input window, operand 1, single buffered']
    #allocation6 [shape = 's32[1]{0}', space=sflag, size = 0x4, scoped, tag = 'scoped memory for tpu_custom_call.1']
    #allocation7 [shape = 'u8[2048]{0}', space=vmem, size = 0x800, scoped, tag = 'input window, operand 2, single buffered']
    #allocation8 [shape = 'u8[262144]{0}', space=vmem, size = 0x40000, scoped, tag = 'input window, operand 3, single buffered']
    #allocation9 [shape = 's32[1]{0}', space=sflag, size = 0x4, scoped, tag = 'scoped memory for tpu_custom_call.1']
    #allocation10 [shape = 'u8[65536]{0}', space=vmem, size = 0x10000, scoped, tag = 'input window, operand 5, single buffered']
    #allocation11 [shape = 'u8[8192]{0}', space=vmem, size = 0x2000, scoped, tag = 'output window, operand 0, single buffered']
    %12 = vsyncpa [#allocation3], 0
    %13 = vsyncpa [#allocation6], 0
    %14 = vsyncpa [#allocation9], 0
    %15 = vsyncpa [#allocation4], 0
    // Predicated region
    $region2: #{tpu_custom_call.1} parent=1 // pred_check
      _
    $region3: #{tpu_custom_call.1} parent=1 // pred_check_branch
      %17 = sbr.rel (0) target = $region5
    $region4: #{tpu_custom_call.1} parent=1 // pred_region
      %s19 = ssub.s32 2048, 2048
      %20 = vsyncadd [#allocation3], %s19
      %s21 = sshll.u32 [#allocation2], 4
      %s22 = int_to_ptr.vmem [resolvable:$true] %s21
      %27 = dma.hbm_to_vmem [thread:$0]  %s0, 2048, %s22, [#allocation3], 1024, 1024, 64
    $region5: #{tpu_custom_call.1} parent=1 // pred_fallthru
      _
    // Predicated region
    $region6: #{tpu_custom_call.1} parent=1 // pred_check
      _
    $region7: #{tpu_custom_call.1} parent=1 // pred_check_branch
      %29 = sbr.rel (0) target = $region9
    $region8: #{tpu_custom_call.1} parent=1 // pred_region
      %s31 = ssub.s32 32768, 32768
      %32 = vsyncadd [#allocation6], %s31
      %s33 = sshll.u32 [#allocation5], 4
      %s34 = int_to_ptr.vmem [resolvable:$true] %s33
      %39 = dma.hbm_to_vmem [thread:$0]  %s1, 32768, %s34, [#allocation6], 256, 256, 16
    $region9: #{tpu_custom_call.1} parent=1 // pred_fallthru
      _
    // Predicated region
    $region10: #{tpu_custom_call.1} parent=1 // pred_check
      _
    $region11: #{tpu_custom_call.1} parent=1 // pred_check_branch
      %41 = sbr.rel (0) target = $region13
    $region12: #{tpu_custom_call.1} parent=1 // pred_region
      %s43 = ssub.s32 64, 64
      %44 = vsyncadd [#allocation6], %s43
      %s46 = sshll.u32 [#allocation7], 4
      %s47 = int_to_ptr.vmem [resolvable:$true] %s46
      %49 = dma.hbm_to_vmem [thread:$0]  %s2, 64, %s47, [#allocation6]
    $region13: #{tpu_custom_call.1} parent=1 // pred_fallthru
      _
    // Predicated region
    $region14: #{tpu_custom_call.1} parent=1 // pred_check
      _
    $region15: #{tpu_custom_call.1} parent=1 // pred_check_branch
      %51 = sbr.rel (0) target = $region17
    $region16: #{tpu_custom_call.1} parent=1 // pred_region
      %s53 = ssub.s32 8192, 8192
      %54 = vsyncadd [#allocation9], %s53
      %s55 = sshll.u32 [#allocation8], 4
      %s56 = int_to_ptr.vmem [resolvable:$true] %s55
      %61 = dma.hbm_to_vmem [thread:$0]  %s3, 8192, %s56, [#allocation9], 128, 128, 8
    $region17: #{tpu_custom_call.1} parent=1 // pred_fallthru
      _
    // Predicated region
    $region18: #{tpu_custom_call.1} parent=1 // pred_check
      _
    $region19: #{tpu_custom_call.1} parent=1 // pred_check_branch
      %63 = sbr.rel (0) target = $region21
    $region20: #{tpu_custom_call.1} parent=1 // pred_region
      _
    $region21: #{tpu_custom_call.1} parent=1 // pred_fallthru
      _
    // Predicated region
    $region22: #{tpu_custom_call.1} parent=1 // pred_check
      _
    $region23: #{tpu_custom_call.1} parent=1 // pred_check_branch
      %65 = sbr.rel (0) target = $region25
    $region24: #{tpu_custom_call.1} parent=1 // pred_region
      %s67 = ssub.s32 2048, 2048
      %68 = vsyncadd [#allocation9], %s67
      %s69 = sshll.u32 [#allocation10], 4
      %s70 = int_to_ptr.vmem [resolvable:$true] %s69
      %75 = dma.hbm_to_vmem [thread:$0]  %s5, 2048, %s70, [#allocation9], 64, 64, 4
    $region25: #{tpu_custom_call.1} parent=1 // pred_fallthru
      _
    // Predicated region
    $region26: #{tpu_custom_call.1} parent=1 // pred_check
      _
    $region27: #{tpu_custom_call.1} parent=1 // pred_check_branch
      %77 = sbr.rel (0) target = $region29
    $region28: #{tpu_custom_call.1} parent=1 // pred_region
      _
    $region29: #{tpu_custom_call.1} parent=1 // pred_fallthru
      _
    // Predicated region
    $region30: #{tpu_custom_call.1} parent=1 // pred_check
      _
    $region31: #{tpu_custom_call.1} parent=1 // pred_check_branch
      %79 = sbr.rel (0) target = $region33
    $region32: #{tpu_custom_call.1} parent=1 // pred_region
      %80 = dma.done [#allocation3], 2048
    $region33: #{tpu_custom_call.1} parent=1 // pred_fallthru
      _
    // Predicated region
    $region34: #{tpu_custom_call.1} parent=1 // pred_check
      _
    $region35: #{tpu_custom_call.1} parent=1 // pred_check_branch
      %82 = sbr.rel (0) target = $region37
    $region36: #{tpu_custom_call.1} parent=1 // pred_region
      %83 = dma.done [#allocation6], 32768
    $region37: #{tpu_custom_call.1} parent=1 // pred_fallthru
      _
    // Predicated region
    $region38: #{tpu_custom_call.1} parent=1 // pred_check
      _
    $region39: #{tpu_custom_call.1} parent=1 // pred_check_branch
      %85 = sbr.rel (0) target = $region41
    $region40: #{tpu_custom_call.1} parent=1 // pred_region
      %86 = dma.done [#allocation6], 64
    $region41: #{tpu_custom_call.1} parent=1 // pred_fallthru
      _
    // Predicated region
    $region42: #{tpu_custom_call.1} parent=1 // pred_check
      _
    $region43: #{tpu_custom_call.1} parent=1 // pred_check_branch
      %88 = sbr.rel (0) target = $region45
    $region44: #{tpu_custom_call.1} parent=1 // pred_region
      %89 = dma.done [#allocation9], 8192
    $region45: #{tpu_custom_call.1} parent=1 // pred_fallthru
      _
    // Predicated region
    $region46: #{tpu_custom_call.1} parent=1 // pred_check
      _
    $region47: #{tpu_custom_call.1} parent=1 // pred_check_branch
      %91 = sbr.rel (0) target = $region49
    $region48: #{tpu_custom_call.1} parent=1 // pred_region
      %92 = dma.done [#allocation9], 2048
    $region49: #{tpu_custom_call.1} parent=1 // pred_fallthru
      _
    %v94 = vld [vmem:[#allocation2] sm:$0xff]
    %v95 = vld [vmem:[#allocation2 + $0x8] sm:$0xff]
    %v96 = vld [vmem:[#allocation2 + $0x10] sm:$0xff]
    %v97 = vld [vmem:[#allocation2 + $0x18] sm:$0xff]
    %v98 = vld [vmem:[#allocation2 + $0x20] sm:$0xff]
    %v99 = vld [vmem:[#allocation2 + $0x28] sm:$0xff]
    %v100 = vld [vmem:[#allocation2 + $0x30] sm:$0xff]
    %v101 = vld [vmem:[#allocation2 + $0x38] sm:$0xff]
    %v102 = vld [vmem:[#allocation2 + $0x40] sm:$0xff]
    %v103 = vld [vmem:[#allocation2 + $0x48] sm:$0xff]
    %v104 = vld [vmem:[#allocation2 + $0x50] sm:$0xff]
    %v105 = vld [vmem:[#allocation2 + $0x58] sm:$0xff]
    %v106 = vld [vmem:[#allocation2 + $0x60] sm:$0xff]
    %v107 = vld [vmem:[#allocation2 + $0x68] sm:$0xff]
    %v108 = vld [vmem:[#allocation2 + $0x70] sm:$0xff]
    %v109 = vld [vmem:[#allocation2 + $0x78] sm:$0xff]
    %v110 = vpack.c.bf16 %v102, %v94
    %v111 = vpack.c.bf16 %v103, %v95
    %v112 = vpack.c.bf16 %v104, %v96
    %v113 = vpack.c.bf16 %v105, %v97
    %v114 = vpack.c.bf16 %v106, %v98
    %v115 = vpack.c.bf16 %v107, %v99
    %v116 = vpack.c.bf16 %v108, %v100
    %v117 = vpack.c.bf16 %v109, %v101
    %v118 = vld [vmem:[#allocation5] sm:$0xff]
    %v119 = vld [vmem:[#allocation5 + $0x8] sm:$0xff]
    %v120 = vld [vmem:[#allocation5 + $0x10] sm:$0xff]
    %v121 = vld [vmem:[#allocation5 + $0x18] sm:$0xff]
    %v122 = vld [vmem:[#allocation5 + $0x20] sm:$0xff]
    %v123 = vld [vmem:[#allocation5 + $0x28] sm:$0xff]
    %v124 = vld [vmem:[#allocation5 + $0x30] sm:$0xff]
    %v125 = vld [vmem:[#allocation5 + $0x38] sm:$0xff]
    %v126 = vld [vmem:[#allocation5 + $0x40] sm:$0xff]
    %v127 = vld [vmem:[#allocation5 + $0x48] sm:$0xff]
    %v128 = vld [vmem:[#allocation5 + $0x50] sm:$0xff]
    %v129 = vld [vmem:[#allocation5 + $0x58] sm:$0xff]
    %v130 = vld [vmem:[#allocation5 + $0x60] sm:$0xff]
    %v131 = vld [vmem:[#allocation5 + $0x68] sm:$0xff]
    %v132 = vld [vmem:[#allocation5 + $0x70] sm:$0xff]
    %v133 = vld [vmem:[#allocation5 + $0x78] sm:$0xff]
    %v134 = vld [vmem:[#allocation5 + $0x80] sm:$0xff]
    %v135 = vld [vmem:[#allocation5 + $0x88] sm:$0xff]
    %v136 = vld [vmem:[#allocation5 + $0x90] sm:$0xff]
    %v137 = vld [vmem:[#allocation5 + $0x98] sm:$0xff]
    %v138 = vld [vmem:[#allocation5 + $0xa0] sm:$0xff]
    %v139 = vld [vmem:[#allocation5 + $0xa8] sm:$0xff]
    %v140 = vld [vmem:[#allocation5 + $0xb0] sm:$0xff]
    %v141 = vld [vmem:[#allocation5 + $0xb8] sm:$0xff]
    %v142 = vld [vmem:[#allocation5 + $0xc0] sm:$0xff]
    %v143 = vld [vmem:[#allocation5 + $0xc8] sm:$0xff]
    %v144 = vld [vmem:[#allocation5 + $0xd0] sm:$0xff]
    %v145 = vld [vmem:[#allocation5 + $0xd8] sm:$0xff]
    %v146 = vld [vmem:[#allocation5 + $0xe0] sm:$0xff]
    %v147 = vld [vmem:[#allocation5 + $0xe8] sm:$0xff]
    %v148 = vld [vmem:[#allocation5 + $0xf0] sm:$0xff]
    %v149 = vld [vmem:[#allocation5 + $0xf8] sm:$0xff]
    %v150 = vld [vmem:[#allocation5 + $0x100] sm:$0xff]
    %v151 = vld [vmem:[#allocation5 + $0x108] sm:$0xff]
    %v152 = vld [vmem:[#allocation5 + $0x110] sm:$0xff]
    %v153 = vld [vmem:[#allocation5 + $0x118] sm:$0xff]
    %v154 = vld [vmem:[#allocation5 + $0x120] sm:$0xff]
    %v155 = vld [vmem:[#allocation5 + $0x128] sm:$0xff]
    %v156 = vld [vmem:[#allocation5 + $0x130] sm:$0xff]
    %v157 = vld [vmem:[#allocation5 + $0x138] sm:$0xff]
    %v158 = vld [vmem:[#allocation5 + $0x140] sm:$0xff]
    %v159 = vld [vmem:[#allocation5 + $0x148] sm:$0xff]
    %v160 = vld [vmem:[#allocation5 + $0x150] sm:$0xff]
    %v161 = vld [vmem:[#allocation5 + $0x158] sm:$0xff]
    %v162 = vld [vmem:[#allocation5 + $0x160] sm:$0xff]
    %v163 = vld [vmem:[#allocation5 + $0x168] sm:$0xff]
    %v164 = vld [vmem:[#allocation5 + $0x170] sm:$0xff]
    %v165 = vld [vmem:[#allocation5 + $0x178] sm:$0xff]
    %v166 = vld [vmem:[#allocation5 + $0x180] sm:$0xff]
    %v167 = vld [vmem:[#allocation5 + $0x188] sm:$0xff]
    %v168 = vld [vmem:[#allocation5 + $0x190] sm:$0xff]
    %v169 = vld [vmem:[#allocation5 + $0x198] sm:$0xff]
    %v170 = vld [vmem:[#allocation5 + $0x1a0] sm:$0xff]
    %v171 = vld [vmem:[#allocation5 + $0x1a8] sm:$0xff]
    %v172 = vld [vmem:[#allocation5 + $0x1b0] sm:$0xff]
    %v173 = vld [vmem:[#allocation5 + $0x1b8] sm:$0xff]
    %v174 = vld [vmem:[#allocation5 + $0x1c0] sm:$0xff]
    %v175 = vld [vmem:[#allocation5 + $0x1c8] sm:$0xff]
    %v176 = vld [vmem:[#allocation5 + $0x1d0] sm:$0xff]
    %v177 = vld [vmem:[#allocation5 + $0x1d8] sm:$0xff]
    %v178 = vld [vmem:[#allocation5 + $0x1e0] sm:$0xff]
    %v179 = vld [vmem:[#allocation5 + $0x1e8] sm:$0xff]
    %v180 = vld [vmem:[#allocation5 + $0x1f0] sm:$0xff]
    %v181 = vld [vmem:[#allocation5 + $0x1f8] sm:$0xff]
    %v182 = vld [vmem:[#allocation5 + $0x200] sm:$0xff]
    %v183 = vld [vmem:[#allocation5 + $0x208] sm:$0xff]
    %v184 = vld [vmem:[#allocation5 + $0x210] sm:$0xff]
    %v185 = vld [vmem:[#allocation5 + $0x218] sm:$0xff]
    %v186 = vld [vmem:[#allocation5 + $0x220] sm:$0xff]
    %v187 = vld [vmem:[#allocation5 + $0x228] sm:$0xff]
    %v188 = vld [vmem:[#allocation5 + $0x230] sm:$0xff]
    %v189 = vld [vmem:[#allocation5 + $0x238] sm:$0xff]
    %v190 = vld [vmem:[#allocation5 + $0x240] sm:$0xff]
    %v191 = vld [vmem:[#allocation5 + $0x248] sm:$0xff]
    %v192 = vld [vmem:[#allocation5 + $0x250] sm:$0xff]
    %v193 = vld [vmem:[#allocation5 + $0x258] sm:$0xff]
    %v194 = vld [vmem:[#allocation5 + $0x260] sm:$0xff]
    %v195 = vld [vmem:[#allocation5 + $0x268] sm:$0xff]
    %v196 = vld [vmem:[#allocation5 + $0x270] sm:$0xff]
    %v197 = vld [vmem:[#allocation5 + $0x278] sm:$0xff]
    %v198 = vld [vmem:[#allocation5 + $0x280] sm:$0xff]
    %v199 = vld [vmem:[#allocation5 + $0x288] sm:$0xff]
    %v200 = vld [vmem:[#allocation5 + $0x290] sm:$0xff]
    %v201 = vld [vmem:[#allocation5 + $0x298] sm:$0xff]
    %v202 = vld [vmem:[#allocation5 + $0x2a0] sm:$0xff]
    %v203 = vld [vmem:[#allocation5 + $0x2a8] sm:$0xff]
    %v204 = vld [vmem:[#allocation5 + $0x2b0] sm:$0xff]
    %v205 = vld [vmem:[#allocation5 + $0x2b8] sm:$0xff]
    %v206 = vld [vmem:[#allocation5 + $0x2c0] sm:$0xff]
    %v207 = vld [vmem:[#allocation5 + $0x2c8] sm:$0xff]
    %v208 = vld [vmem:[#allocation5 + $0x2d0] sm:$0xff]
    %v209 = vld [vmem:[#allocation5 + $0x2d8] sm:$0xff]
    %v210 = vld [vmem:[#allocation5 + $0x2e0] sm:$0xff]
    %v211 = vld [vmem:[#allocation5 + $0x2e8] sm:$0xff]
    %v212 = vld [vmem:[#allocation5 + $0x2f0] sm:$0xff]
    %v213 = vld [vmem:[#allocation5 + $0x2f8] sm:$0xff]
    %v214 = vld [vmem:[#allocation5 + $0x300] sm:$0xff]
    %v215 = vld [vmem:[#allocation5 + $0x308] sm:$0xff]
    %v216 = vld [vmem:[#allocation5 + $0x310] sm:$0xff]
    %v217 = vld [vmem:[#allocation5 + $0x318] sm:$0xff]
    %v218 = vld [vmem:[#allocation5 + $0x320] sm:$0xff]
    %v219 = vld [vmem:[#allocation5 + $0x328] sm:$0xff]
    %v220 = vld [vmem:[#allocation5 + $0x330] sm:$0xff]
    %v221 = vld [vmem:[#allocation5 + $0x338] sm:$0xff]
    %v222 = vld [vmem:[#allocation5 + $0x340] sm:$0xff]
    %v223 = vld [vmem:[#allocation5 + $0x348] sm:$0xff]
    %v224 = vld [vmem:[#allocation5 + $0x350] sm:$0xff]
    %v225 = vld [vmem:[#allocation5 + $0x358] sm:$0xff]
    %v226 = vld [vmem:[#allocation5 + $0x360] sm:$0xff]
    %v227 = vld [vmem:[#allocation5 + $0x368] sm:$0xff]
    %v228 = vld [vmem:[#allocation5 + $0x370] sm:$0xff]
    %v229 = vld [vmem:[#allocation5 + $0x378] sm:$0xff]
    %v230 = vld [vmem:[#allocation5 + $0x380] sm:$0xff]
    %v231 = vld [vmem:[#allocation5 + $0x388] sm:$0xff]
    %v232 = vld [vmem:[#allocation5 + $0x390] sm:$0xff]
    %v233 = vld [vmem:[#allocation5 + $0x398] sm:$0xff]
    %v234 = vld [vmem:[#allocation5 + $0x3a0] sm:$0xff]
    %v235 = vld [vmem:[#allocation5 + $0x3a8] sm:$0xff]
    %v236 = vld [vmem:[#allocation5 + $0x3b0] sm:$0xff]
    %v237 = vld [vmem:[#allocation5 + $0x3b8] sm:$0xff]
    %v238 = vld [vmem:[#allocation5 + $0x3c0] sm:$0xff]
    %v239 = vld [vmem:[#allocation5 + $0x3c8] sm:$0xff]
    %v240 = vld [vmem:[#allocation5 + $0x3d0] sm:$0xff]
    %v241 = vld [vmem:[#allocation5 + $0x3d8] sm:$0xff]
    %v242 = vld [vmem:[#allocation5 + $0x3e0] sm:$0xff]
    %v243 = vld [vmem:[#allocation5 + $0x3e8] sm:$0xff]
    %v244 = vld [vmem:[#allocation5 + $0x3f0] sm:$0xff]
    %v245 = vld [vmem:[#allocation5 + $0x3f8] sm:$0xff]
    %v246 = vld [vmem:[#allocation5 + $0x400] sm:$0xff]
    %v247 = vld [vmem:[#allocation5 + $0x408] sm:$0xff]
    %v248 = vld [vmem:[#allocation5 + $0x410] sm:$0xff]
    %v249 = vld [vmem:[#allocation5 + $0x418] sm:$0xff]
    %v250 = vld [vmem:[#allocation5 + $0x420] sm:$0xff]
    %v251 = vld [vmem:[#allocation5 + $0x428] sm:$0xff]
    %v252 = vld [vmem:[#allocation5 + $0x430] sm:$0xff]
    %v253 = vld [vmem:[#allocation5 + $0x438] sm:$0xff]
    %v254 = vld [vmem:[#allocation5 + $0x440] sm:$0xff]
    %v255 = vld [vmem:[#allocation5 + $0x448] sm:$0xff]
    %v256 = vld [vmem:[#allocation5 + $0x450] sm:$0xff]
    %v257 = vld [vmem:[#allocation5 + $0x458] sm:$0xff]
    %v258 = vld [vmem:[#allocation5 + $0x460] sm:$0xff]
    %v259 = vld [vmem:[#allocation5 + $0x468] sm:$0xff]
    %v260 = vld [vmem:[#allocation5 + $0x470] sm:$0xff]
    %v261 = vld [vmem:[#allocation5 + $0x478] sm:$0xff]
    %v262 = vld [vmem:[#allocation5 + $0x480] sm:$0xff]
    %v263 = vld [vmem:[#allocation5 + $0x488] sm:$0xff]
    %v264 = vld [vmem:[#allocation5 + $0x490] sm:$0xff]
    %v265 = vld [vmem:[#allocation5 + $0x498] sm:$0xff]
    %v266 = vld [vmem:[#allocation5 + $0x4a0] sm:$0xff]
    %v267 = vld [vmem:[#allocation5 + $0x4a8] sm:$0xff]
    %v268 = vld [vmem:[#allocation5 + $0x4b0] sm:$0xff]
    %v269 = vld [vmem:[#allocation5 + $0x4b8] sm:$0xff]
    %v270 = vld [vmem:[#allocation5 + $0x4c0] sm:$0xff]
    %v271 = vld [vmem:[#allocation5 + $0x4c8] sm:$0xff]
    %v272 = vld [vmem:[#allocation5 + $0x4d0] sm:$0xff]
    %v273 = vld [vmem:[#allocation5 + $0x4d8] sm:$0xff]
    %v274 = vld [vmem:[#allocation5 + $0x4e0] sm:$0xff]
    %v275 = vld [vmem:[#allocation5 + $0x4e8] sm:$0xff]
    %v276 = vld [vmem:[#allocation5 + $0x4f0] sm:$0xff]
    %v277 = vld [vmem:[#allocation5 + $0x4f8] sm:$0xff]
    %v278 = vld [vmem:[#allocation5 + $0x500] sm:$0xff]
    %v279 = vld [vmem:[#allocation5 + $0x508] sm:$0xff]
    %v280 = vld [vmem:[#allocation5 + $0x510] sm:$0xff]
    %v281 = vld [vmem:[#allocation5 + $0x518] sm:$0xff]
    %v282 = vld [vmem:[#allocation5 + $0x520] sm:$0xff]
    %v283 = vld [vmem:[#allocation5 + $0x528] sm:$0xff]
    %v284 = vld [vmem:[#allocation5 + $0x530] sm:$0xff]
    %v285 = vld [vmem:[#allocation5 + $0x538] sm:$0xff]
    %v286 = vld [vmem:[#allocation5 + $0x540] sm:$0xff]
    %v287 = vld [vmem:[#allocation5 + $0x548] sm:$0xff]
    %v288 = vld [vmem:[#allocation5 + $0x550] sm:$0xff]
    %v289 = vld [vmem:[#allocation5 + $0x558] sm:$0xff]
    %v290 = vld [vmem:[#allocation5 + $0x560] sm:$0xff]
    %v291 = vld [vmem:[#allocation5 + $0x568] sm:$0xff]
    %v292 = vld [vmem:[#allocation5 + $0x570] sm:$0xff]
    %v293 = vld [vmem:[#allocation5 + $0x578] sm:$0xff]
    %v294 = vld [vmem:[#allocation5 + $0x580] sm:$0xff]
    %v295 = vld [vmem:[#allocation5 + $0x588] sm:$0xff]
    %v296 = vld [vmem:[#allocation5 + $0x590] sm:$0xff]
    %v297 = vld [vmem:[#allocation5 + $0x598] sm:$0xff]
    %v298 = vld [vmem:[#allocation5 + $0x5a0] sm:$0xff]
    %v299 = vld [vmem:[#allocation5 + $0x5a8] sm:$0xff]
    %v300 = vld [vmem:[#allocation5 + $0x5b0] sm:$0xff]
    %v301 = vld [vmem:[#allocation5 + $0x5b8] sm:$0xff]
    %v302 = vld [vmem:[#allocation5 + $0x5c0] sm:$0xff]
    %v303 = vld [vmem:[#allocation5 + $0x5c8] sm:$0xff]
    %v304 = vld [vmem:[#allocation5 + $0x5d0] sm:$0xff]
    %v305 = vld [vmem:[#allocation5 + $0x5d8] sm:$0xff]
    %v306 = vld [vmem:[#allocation5 + $0x5e0] sm:$0xff]
    %v307 = vld [vmem:[#allocation5 + $0x5e8] sm:$0xff]
    %v308 = vld [vmem:[#allocation5 + $0x5f0] sm:$0xff]
    %v309 = vld [vmem:[#allocation5 + $0x5f8] sm:$0xff]
    %v310 = vld [vmem:[#allocation5 + $0x600] sm:$0xff]
    %v311 = vld [vmem:[#allocation5 + $0x608] sm:$0xff]
    %v312 = vld [vmem:[#allocation5 + $0x610] sm:$0xff]
    %v313 = vld [vmem:[#allocation5 + $0x618] sm:$0xff]
    %v314 = vld [vmem:[#allocation5 + $0x620] sm:$0xff]
    %v315 = vld [vmem:[#allocation5 + $0x628] sm:$0xff]
    %v316 = vld [vmem:[#allocation5 + $0x630] sm:$0xff]
    %v317 = vld [vmem:[#allocation5 + $0x638] sm:$0xff]
    %v318 = vld [vmem:[#allocation5 + $0x640] sm:$0xff]
    %v319 = vld [vmem:[#allocation5 + $0x648] sm:$0xff]
    %v320 = vld [vmem:[#allocation5 + $0x650] sm:$0xff]
    %v321 = vld [vmem:[#allocation5 + $0x658] sm:$0xff]
    %v322 = vld [vmem:[#allocation5 + $0x660] sm:$0xff]
    %v323 = vld [vmem:[#allocation5 + $0x668] sm:$0xff]
    %v324 = vld [vmem:[#allocation5 + $0x670] sm:$0xff]
    %v325 = vld [vmem:[#allocation5 + $0x678] sm:$0xff]
    %v326 = vld [vmem:[#allocation5 + $0x680] sm:$0xff]
    %v327 = vld [vmem:[#allocation5 + $0x688] sm:$0xff]
    %v328 = vld [vmem:[#allocation5 + $0x690] sm:$0xff]
    %v329 = vld [vmem:[#allocation5 + $0x698] sm:$0xff]
    %v330 = vld [vmem:[#allocation5 + $0x6a0] sm:$0xff]
    %v331 = vld [vmem:[#allocation5 + $0x6a8] sm:$0xff]
    %v332 = vld [vmem:[#allocation5 + $0x6b0] sm:$0xff]
    %v333 = vld [vmem:[#allocation5 + $0x6b8] sm:$0xff]
    %v334 = vld [vmem:[#allocation5 + $0x6c0] sm:$0xff]
    %v335 = vld [vmem:[#allocation5 + $0x6c8] sm:$0xff]
    %v336 = vld [vmem:[#allocation5 + $0x6d0] sm:$0xff]
    %v337 = vld [vmem:[#allocation5 + $0x6d8] sm:$0xff]
    %v338 = vld [vmem:[#allocation5 + $0x6e0] sm:$0xff]
    %v339 = vld [vmem:[#allocation5 + $0x6e8] sm:$0xff]
    %v340 = vld [vmem:[#allocation5 + $0x6f0] sm:$0xff]
    %v341 = vld [vmem:[#allocation5 + $0x6f8] sm:$0xff]
    %v342 = vld [vmem:[#allocation5 + $0x700] sm:$0xff]
    %v343 = vld [vmem:[#allocation5 + $0x708] sm:$0xff]
    %v344 = vld [vmem:[#allocation5 + $0x710] sm:$0xff]
    %v345 = vld [vmem:[#allocation5 + $0x718] sm:$0xff]
    %v346 = vld [vmem:[#allocation5 + $0x720] sm:$0xff]
    %v347 = vld [vmem:[#allocation5 + $0x728] sm:$0xff]
    %v348 = vld [vmem:[#allocation5 + $0x730] sm:$0xff]
    %v349 = vld [vmem:[#allocation5 + $0x738] sm:$0xff]
    %v350 = vld [vmem:[#allocation5 + $0x740] sm:$0xff]
    %v351 = vld [vmem:[#allocation5 + $0x748] sm:$0xff]
    %v352 = vld [vmem:[#allocation5 + $0x750] sm:$0xff]
    %v353 = vld [vmem:[#allocation5 + $0x758] sm:$0xff]
    %v354 = vld [vmem:[#allocation5 + $0x760] sm:$0xff]
    %v355 = vld [vmem:[#allocation5 + $0x768] sm:$0xff]
    %v356 = vld [vmem:[#allocation5 + $0x770] sm:$0xff]
    %v357 = vld [vmem:[#allocation5 + $0x778] sm:$0xff]
    %v358 = vld [vmem:[#allocation5 + $0x780] sm:$0xff]
    %v359 = vld [vmem:[#allocation5 + $0x788] sm:$0xff]
    %v360 = vld [vmem:[#allocation5 + $0x790] sm:$0xff]
    %v361 = vld [vmem:[#allocation5 + $0x798] sm:$0xff]
    %v362 = vld [vmem:[#allocation5 + $0x7a0] sm:$0xff]
    %v363 = vld [vmem:[#allocation5 + $0x7a8] sm:$0xff]
    %v364 = vld [vmem:[#allocation5 + $0x7b0] sm:$0xff]
    %v365 = vld [vmem:[#allocation5 + $0x7b8] sm:$0xff]
    %v366 = vld [vmem:[#allocation5 + $0x7c0] sm:$0xff]
    %v367 = vld [vmem:[#allocation5 + $0x7c8] sm:$0xff]
    %v368 = vld [vmem:[#allocation5 + $0x7d0] sm:$0xff]
    %v369 = vld [vmem:[#allocation5 + $0x7d8] sm:$0xff]
    %v370 = vld [vmem:[#allocation5 + $0x7e0] sm:$0xff]
    %v371 = vld [vmem:[#allocation5 + $0x7e8] sm:$0xff]
    %v372 = vld [vmem:[#allocation5 + $0x7f0] sm:$0xff]
    %v373 = vld [vmem:[#allocation5 + $0x7f8] sm:$0xff]
    %v374 = vld [vmem:[#allocation7] sm:$0xf]
    %v376 = vlaneseq
    %v377 = vshrl.u32 %v376, 7
    %v378 = vsub.s32 0, %v377
    %v379 = vrot.slane %v374, %v378
    %v380 = vlaneseq
    %v381 = vshrl.u32 %v380, 7
    %v382 = vsub.s32 1, %v381
    %v383 = vrot.slane %v374, %v382
    %v384 = vlaneseq
    %v385 = vshrl.u32 %v384, 7
    %v386 = vsub.s32 2, %v385
    %v387 = vrot.slane %v374, %v386
    %v388 = vlaneseq
    %v389 = vshrl.u32 %v388, 7
    %v390 = vsub.s32 3, %v389
    %v391 = vrot.slane %v374, %v390
    %v652 = vunpack.c.l.b16 %v118
    %v653 = vunpack.c.h.b16 %v118
    %v654 = vunpack.c.l.b16 %v119
    %v655 = vunpack.c.h.b16 %v119
    %v656 = vunpack.c.l.b16 %v120
    %v657 = vunpack.c.h.b16 %v120
    %v658 = vunpack.c.l.b16 %v121
    %v659 = vunpack.c.h.b16 %v121
    %v660 = vunpack.c.l.b16 %v122
    %v661 = vunpack.c.h.b16 %v122
    %v662 = vunpack.c.l.b16 %v123
    %v663 = vunpack.c.h.b16 %v123
    %v664 = vunpack.c.l.b16 %v124
    %v665 = vunpack.c.h.b16 %v124
    %v666 = vunpack.c.l.b16 %v125
    %v667 = vunpack.c.h.b16 %v125
    %v668 = vunpack.c.l.b16 %v126
    %v669 = vunpack.c.h.b16 %v126
    %v670 = vunpack.c.l.b16 %v127
    %v671 = vunpack.c.h.b16 %v127
    %v672 = vunpack.c.l.b16 %v128
    %v673 = vunpack.c.h.b16 %v128
    %v674 = vunpack.c.l.b16 %v129
    %v675 = vunpack.c.h.b16 %v129
    %v676 = vunpack.c.l.b16 %v130
    %v677 = vunpack.c.h.b16 %v130
    %v678 = vunpack.c.l.b16 %v131
    %v679 = vunpack.c.h.b16 %v131
    %v680 = vunpack.c.l.b16 %v132
    %v681 = vunpack.c.h.b16 %v132
    %v682 = vunpack.c.l.b16 %v133
    %v683 = vunpack.c.h.b16 %v133
    %v684 = vunpack.c.l.b16 %v134
    %v685 = vunpack.c.h.b16 %v134
    %v686 = vunpack.c.l.b16 %v135
    %v687 = vunpack.c.h.b16 %v135
    %v688 = vunpack.c.l.b16 %v136
    %v689 = vunpack.c.h.b16 %v136
    %v690 = vunpack.c.l.b16 %v137
    %v691 = vunpack.c.h.b16 %v137
    %v692 = vunpack.c.l.b16 %v138
    %v693 = vunpack.c.h.b16 %v138
    %v694 = vunpack.c.l.b16 %v139
    %v695 = vunpack.c.h.b16 %v139
    %v696 = vunpack.c.l.b16 %v140
    %v697 = vunpack.c.h.b16 %v140
    %v698 = vunpack.c.l.b16 %v141
    %v699 = vunpack.c.h.b16 %v141
    %v700 = vunpack.c.l.b16 %v142
    %v701 = vunpack.c.h.b16 %v142
    %v702 = vunpack.c.l.b16 %v143
    %v703 = vunpack.c.h.b16 %v143
    %v704 = vunpack.c.l.b16 %v144
    %v705 = vunpack.c.h.b16 %v144
    %v706 = vunpack.c.l.b16 %v145
    %v707 = vunpack.c.h.b16 %v145
    %v708 = vunpack.c.l.b16 %v146
    %v709 = vunpack.c.h.b16 %v146
    %v710 = vunpack.c.l.b16 %v147
    %v711 = vunpack.c.h.b16 %v147
    %v712 = vunpack.c.l.b16 %v148
    %v713 = vunpack.c.h.b16 %v148
    %v714 = vunpack.c.l.b16 %v149
    %v715 = vunpack.c.h.b16 %v149
    %v716 = vunpack.c.l.b16 %v150
    %v717 = vunpack.c.h.b16 %v150
    %v718 = vunpack.c.l.b16 %v151
    %v719 = vunpack.c.h.b16 %v151
    %v720 = vunpack.c.l.b16 %v152
    %v721 = vunpack.c.h.b16 %v152
    %v722 = vunpack.c.l.b16 %v153
    %v723 = vunpack.c.h.b16 %v153
    %v724 = vunpack.c.l.b16 %v154
    %v725 = vunpack.c.h.b16 %v154
    %v726 = vunpack.c.l.b16 %v155
    %v727 = vunpack.c.h.b16 %v155
    %v728 = vunpack.c.l.b16 %v156
    %v729 = vunpack.c.h.b16 %v156
    %v730 = vunpack.c.l.b16 %v157
    %v731 = vunpack.c.h.b16 %v157
    %v732 = vunpack.c.l.b16 %v158
    %v733 = vunpack.c.h.b16 %v158
    %v734 = vunpack.c.l.b16 %v159
    %v735 = vunpack.c.h.b16 %v159
    %v736 = vunpack.c.l.b16 %v160
    %v737 = vunpack.c.h.b16 %v160
    %v738 = vunpack.c.l.b16 %v161
    %v739 = vunpack.c.h.b16 %v161
    %v740 = vunpack.c.l.b16 %v162
    %v741 = vunpack.c.h.b16 %v162
    %v742 = vunpack.c.l.b16 %v163
    %v743 = vunpack.c.h.b16 %v163
    %v744 = vunpack.c.l.b16 %v164
    %v745 = vunpack.c.h.b16 %v164
    %v746 = vunpack.c.l.b16 %v165
    %v747 = vunpack.c.h.b16 %v165
    %v748 = vunpack.c.l.b16 %v166
    %v749 = vunpack.c.h.b16 %v166
    %v750 = vunpack.c.l.b16 %v167
    %v751 = vunpack.c.h.b16 %v167
    %v752 = vunpack.c.l.b16 %v168
    %v753 = vunpack.c.h.b16 %v168
    %v754 = vunpack.c.l.b16 %v169
    %v755 = vunpack.c.h.b16 %v169
    %v756 = vunpack.c.l.b16 %v170
    %v757 = vunpack.c.h.b16 %v170
    %v758 = vunpack.c.l.b16 %v171
    %v759 = vunpack.c.h.b16 %v171
    %v760 = vunpack.c.l.b16 %v172
    %v761 = vunpack.c.h.b16 %v172
    %v762 = vunpack.c.l.b16 %v173
    %v763 = vunpack.c.h.b16 %v173
    %v764 = vunpack.c.l.b16 %v174
    %v765 = vunpack.c.h.b16 %v174
    %v766 = vunpack.c.l.b16 %v175
    %v767 = vunpack.c.h.b16 %v175
    %v768 = vunpack.c.l.b16 %v176
    %v769 = vunpack.c.h.b16 %v176
    %v770 = vunpack.c.l.b16 %v177
    %v771 = vunpack.c.h.b16 %v177
    %v772 = vunpack.c.l.b16 %v178
    %v773 = vunpack.c.h.b16 %v178
    %v774 = vunpack.c.l.b16 %v179
    %v775 = vunpack.c.h.b16 %v179
    %v776 = vunpack.c.l.b16 %v180
    %v777 = vunpack.c.h.b16 %v180
    %v778 = vunpack.c.l.b16 %v181
    %v779 = vunpack.c.h.b16 %v181
    %v780 = vunpack.c.l.b16 %v182
    %v781 = vunpack.c.h.b16 %v182
    %v782 = vunpack.c.l.b16 %v183
    %v783 = vunpack.c.h.b16 %v183
    %v784 = vunpack.c.l.b16 %v184
    %v785 = vunpack.c.h.b16 %v184
    %v786 = vunpack.c.l.b16 %v185
    %v787 = vunpack.c.h.b16 %v185
    %v788 = vunpack.c.l.b16 %v186
    %v789 = vunpack.c.h.b16 %v186
    %v790 = vunpack.c.l.b16 %v187
    %v791 = vunpack.c.h.b16 %v187
    %v792 = vunpack.c.l.b16 %v188
    %v793 = vunpack.c.h.b16 %v188
    %v794 = vunpack.c.l.b16 %v189
    %v795 = vunpack.c.h.b16 %v189
    %v796 = vunpack.c.l.b16 %v190
    %v797 = vunpack.c.h.b16 %v190
    %v798 = vunpack.c.l.b16 %v191
    %v799 = vunpack.c.h.b16 %v191
    %v800 = vunpack.c.l.b16 %v192
    %v801 = vunpack.c.h.b16 %v192
    %v802 = vunpack.c.l.b16 %v193
    %v803 = vunpack.c.h.b16 %v193
    %v804 = vunpack.c.l.b16 %v194
    %v805 = vunpack.c.h.b16 %v194
    %v806 = vunpack.c.l.b16 %v195
    %v807 = vunpack.c.h.b16 %v195
    %v808 = vunpack.c.l.b16 %v196
    %v809 = vunpack.c.h.b16 %v196
    %v810 = vunpack.c.l.b16 %v197
    %v811 = vunpack.c.h.b16 %v197
    %v812 = vunpack.c.l.b16 %v198
    %v813 = vunpack.c.h.b16 %v198
    %v814 = vunpack.c.l.b16 %v199
    %v815 = vunpack.c.h.b16 %v199
    %v816 = vunpack.c.l.b16 %v200
    %v817 = vunpack.c.h.b16 %v200
    %v818 = vunpack.c.l.b16 %v201
    %v819 = vunpack.c.h.b16 %v201
    %v820 = vunpack.c.l.b16 %v202
    %v821 = vunpack.c.h.b16 %v202
    %v822 = vunpack.c.l.b16 %v203
    %v823 = vunpack.c.h.b16 %v203
    %v824 = vunpack.c.l.b16 %v204
    %v825 = vunpack.c.h.b16 %v204
    %v826 = vunpack.c.l.b16 %v205
    %v827 = vunpack.c.h.b16 %v205
    %v828 = vunpack.c.l.b16 %v206
    %v829 = vunpack.c.h.b16 %v206
    %v830 = vunpack.c.l.b16 %v207
    %v831 = vunpack.c.h.b16 %v207
    %v832 = vunpack.c.l.b16 %v208
    %v833 = vunpack.c.h.b16 %v208
    %v834 = vunpack.c.l.b16 %v209
    %v835 = vunpack.c.h.b16 %v209
    %v836 = vunpack.c.l.b16 %v210
    %v837 = vunpack.c.h.b16 %v210
    %v838 = vunpack.c.l.b16 %v211
    %v839 = vunpack.c.h.b16 %v211
    %v840 = vunpack.c.l.b16 %v212
    %v841 = vunpack.c.h.b16 %v212
    %v842 = vunpack.c.l.b16 %v213
    %v843 = vunpack.c.h.b16 %v213
    %v844 = vunpack.c.l.b16 %v214
    %v845 = vunpack.c.h.b16 %v214
    %v846 = vunpack.c.l.b16 %v215
    %v847 = vunpack.c.h.b16 %v215
    %v848 = vunpack.c.l.b16 %v216
    %v849 = vunpack.c.h.b16 %v216
    %v850 = vunpack.c.l.b16 %v217
    %v851 = vunpack.c.h.b16 %v217
    %v852 = vunpack.c.l.b16 %v218
    %v853 = vunpack.c.h.b16 %v218
    %v854 = vunpack.c.l.b16 %v219
    %v855 = vunpack.c.h.b16 %v219
    %v856 = vunpack.c.l.b16 %v220
    %v857 = vunpack.c.h.b16 %v220
    %v858 = vunpack.c.l.b16 %v221
    %v859 = vunpack.c.h.b16 %v221
    %v860 = vunpack.c.l.b16 %v222
    %v861 = vunpack.c.h.b16 %v222
    %v862 = vunpack.c.l.b16 %v223
    %v863 = vunpack.c.h.b16 %v223
    %v864 = vunpack.c.l.b16 %v224
    %v865 = vunpack.c.h.b16 %v224
    %v866 = vunpack.c.l.b16 %v225
    %v867 = vunpack.c.h.b16 %v225
    %v868 = vunpack.c.l.b16 %v226
    %v869 = vunpack.c.h.b16 %v226
    %v870 = vunpack.c.l.b16 %v227
    %v871 = vunpack.c.h.b16 %v227
    %v872 = vunpack.c.l.b16 %v228
    %v873 = vunpack.c.h.b16 %v228
    %v874 = vunpack.c.l.b16 %v229
    %v875 = vunpack.c.h.b16 %v229
    %v876 = vunpack.c.l.b16 %v230
    %v877 = vunpack.c.h.b16 %v230
    %v878 = vunpack.c.l.b16 %v231
    %v879 = vunpack.c.h.b16 %v231
    %v880 = vunpack.c.l.b16 %v232
    %v881 = vunpack.c.h.b16 %v232
    %v882 = vunpack.c.l.b16 %v233
    %v883 = vunpack.c.h.b16 %v233
    %v884 = vunpack.c.l.b16 %v234
    %v885 = vunpack.c.h.b16 %v234
    %v886 = vunpack.c.l.b16 %v235
    %v887 = vunpack.c.h.b16 %v235
    %v888 = vunpack.c.l.b16 %v236
    %v889 = vunpack.c.h.b16 %v236
    %v890 = vunpack.c.l.b16 %v237
    %v891 = vunpack.c.h.b16 %v237
    %v892 = vunpack.c.l.b16 %v238
    %v893 = vunpack.c.h.b16 %v238
    %v894 = vunpack.c.l.b16 %v239
    %v895 = vunpack.c.h.b16 %v239
    %v896 = vunpack.c.l.b16 %v240
    %v897 = vunpack.c.h.b16 %v240
    %v898 = vunpack.c.l.b16 %v241
    %v899 = vunpack.c.h.b16 %v241
    %v900 = vunpack.c.l.b16 %v242
    %v901 = vunpack.c.h.b16 %v242
    %v902 = vunpack.c.l.b16 %v243
    %v903 = vunpack.c.h.b16 %v243
    %v904 = vunpack.c.l.b16 %v244
    %v905 = vunpack.c.h.b16 %v244
    %v906 = vunpack.c.l.b16 %v245
    %v907 = vunpack.c.h.b16 %v245
    %v908 = vunpack.c.l.b16 %v246
    %v909 = vunpack.c.h.b16 %v246
    %v910 = vunpack.c.l.b16 %v247
    %v911 = vunpack.c.h.b16 %v247
    %v912 = vunpack.c.l.b16 %v248
    %v913 = vunpack.c.h.b16 %v248
    %v914 = vunpack.c.l.b16 %v249
    %v915 = vunpack.c.h.b16 %v249
    %v916 = vunpack.c.l.b16 %v250
    %v917 = vunpack.c.h.b16 %v250
    %v918 = vunpack.c.l.b16 %v251
    %v919 = vunpack.c.h.b16 %v251
    %v920 = vunpack.c.l.b16 %v252
    %v921 = vunpack.c.h.b16 %v252
    %v922 = vunpack.c.l.b16 %v253
    %v923 = vunpack.c.h.b16 %v253
    %v924 = vunpack.c.l.b16 %v254
    %v925 = vunpack.c.h.b16 %v254
    %v926 = vunpack.c.l.b16 %v255
    %v927 = vunpack.c.h.b16 %v255
    %v928 = vunpack.c.l.b16 %v256
    %v929 = vunpack.c.h.b16 %v256
    %v930 = vunpack.c.l.b16 %v257
    %v931 = vunpack.c.h.b16 %v257
    %v932 = vunpack.c.l.b16 %v258
    %v933 = vunpack.c.h.b16 %v258
    %v934 = vunpack.c.l.b16 %v259
    %v935 = vunpack.c.h.b16 %v259
    %v936 = vunpack.c.l.b16 %v260
    %v937 = vunpack.c.h.b16 %v260
    %v938 = vunpack.c.l.b16 %v261
    %v939 = vunpack.c.h.b16 %v261
    %v940 = vunpack.c.l.b16 %v262
    %v941 = vunpack.c.h.b16 %v262
    %v942 = vunpack.c.l.b16 %v263
    %v943 = vunpack.c.h.b16 %v263
    %v944 = vunpack.c.l.b16 %v264
    %v945 = vunpack.c.h.b16 %v264
    %v946 = vunpack.c.l.b16 %v265
    %v947 = vunpack.c.h.b16 %v265
    %v948 = vunpack.c.l.b16 %v266
    %v949 = vunpack.c.h.b16 %v266
    %v950 = vunpack.c.l.b16 %v267
    %v951 = vunpack.c.h.b16 %v267
    %v952 = vunpack.c.l.b16 %v268
    %v953 = vunpack.c.h.b16 %v268
    %v954 = vunpack.c.l.b16 %v269
    %v955 = vunpack.c.h.b16 %v269
    %v956 = vunpack.c.l.b16 %v270
    %v957 = vunpack.c.h.b16 %v270
    %v958 = vunpack.c.l.b16 %v271
    %v959 = vunpack.c.h.b16 %v271
    %v960 = vunpack.c.l.b16 %v272
    %v961 = vunpack.c.h.b16 %v272
    %v962 = vunpack.c.l.b16 %v273
    %v963 = vunpack.c.h.b16 %v273
    %v964 = vunpack.c.l.b16 %v274
    %v965 = vunpack.c.h.b16 %v274
    %v966 = vunpack.c.l.b16 %v275
    %v967 = vunpack.c.h.b16 %v275
    %v968 = vunpack.c.l.b16 %v276
    %v969 = vunpack.c.h.b16 %v276
    %v970 = vunpack.c.l.b16 %v277
    %v971 = vunpack.c.h.b16 %v277
    %v972 = vunpack.c.l.b16 %v278
    %v973 = vunpack.c.h.b16 %v278
    %v974 = vunpack.c.l.b16 %v279
    %v975 = vunpack.c.h.b16 %v279
    %v976 = vunpack.c.l.b16 %v280
    %v977 = vunpack.c.h.b16 %v280
    %v978 = vunpack.c.l.b16 %v281
    %v979 = vunpack.c.h.b16 %v281
    %v980 = vunpack.c.l.b16 %v282
    %v981 = vunpack.c.h.b16 %v282
    %v982 = vunpack.c.l.b16 %v283
    %v983 = vunpack.c.h.b16 %v283
    %v984 = vunpack.c.l.b16 %v284
    %v985 = vunpack.c.h.b16 %v284
    %v986 = vunpack.c.l.b16 %v285
    %v987 = vunpack.c.h.b16 %v285
    %v988 = vunpack.c.l.b16 %v286
    %v989 = vunpack.c.h.b16 %v286
    %v990 = vunpack.c.l.b16 %v287
    %v991 = vunpack.c.h.b16 %v287
    %v992 = vunpack.c.l.b16 %v288
    %v993 = vunpack.c.h.b16 %v288
    %v994 = vunpack.c.l.b16 %v289
    %v995 = vunpack.c.h.b16 %v289
    %v996 = vunpack.c.l.b16 %v290
    %v997 = vunpack.c.h.b16 %v290
    %v998 = vunpack.c.l.b16 %v291
    %v999 = vunpack.c.h.b16 %v291
    %v1000 = vunpack.c.l.b16 %v292
    %v1001 = vunpack.c.h.b16 %v292
    %v1002 = vunpack.c.l.b16 %v293
    %v1003 = vunpack.c.h.b16 %v293
    %v1004 = vunpack.c.l.b16 %v294
    %v1005 = vunpack.c.h.b16 %v294
    %v1006 = vunpack.c.l.b16 %v295
    %v1007 = vunpack.c.h.b16 %v295
    %v1008 = vunpack.c.l.b16 %v296
    %v1009 = vunpack.c.h.b16 %v296
    %v1010 = vunpack.c.l.b16 %v297
    %v1011 = vunpack.c.h.b16 %v297
    %v1012 = vunpack.c.l.b16 %v298
    %v1013 = vunpack.c.h.b16 %v298
    %v1014 = vunpack.c.l.b16 %v299
    %v1015 = vunpack.c.h.b16 %v299
    %v1016 = vunpack.c.l.b16 %v300
    %v1017 = vunpack.c.h.b16 %v300
    %v1018 = vunpack.c.l.b16 %v301
    %v1019 = vunpack.c.h.b16 %v301
    %v1020 = vunpack.c.l.b16 %v302
    %v1021 = vunpack.c.h.b16 %v302
    %v1022 = vunpack.c.l.b16 %v303
    %v1023 = vunpack.c.h.b16 %v303
    %v1024 = vunpack.c.l.b16 %v304
    %v1025 = vunpack.c.h.b16 %v304
    %v1026 = vunpack.c.l.b16 %v305
    %v1027 = vunpack.c.h.b16 %v305
    %v1028 = vunpack.c.l.b16 %v306
    %v1029 = vunpack.c.h.b16 %v306
    %v1030 = vunpack.c.l.b16 %v307
    %v1031 = vunpack.c.h.b16 %v307
    %v1032 = vunpack.c.l.b16 %v308
    %v1033 = vunpack.c.h.b16 %v308
    %v1034 = vunpack.c.l.b16 %v309
    %v1035 = vunpack.c.h.b16 %v309
    %v1036 = vunpack.c.l.b16 %v310
    %v1037 = vunpack.c.h.b16 %v310
    %v1038 = vunpack.c.l.b16 %v311
    %v1039 = vunpack.c.h.b16 %v311
    %v1040 = vunpack.c.l.b16 %v312
    %v1041 = vunpack.c.h.b16 %v312
    %v1042 = vunpack.c.l.b16 %v313
    %v1043 = vunpack.c.h.b16 %v313
    %v1044 = vunpack.c.l.b16 %v314
    %v1045 = vunpack.c.h.b16 %v314
    %v1046 = vunpack.c.l.b16 %v315
    %v1047 = vunpack.c.h.b16 %v315
    %v1048 = vunpack.c.l.b16 %v316
    %v1049 = vunpack.c.h.b16 %v316
    %v1050 = vunpack.c.l.b16 %v317
    %v1051 = vunpack.c.h.b16 %v317
    %v1052 = vunpack.c.l.b16 %v318
    %v1053 = vunpack.c.h.b16 %v318
    %v1054 = vunpack.c.l.b16 %v319
    %v1055 = vunpack.c.h.b16 %v319
    %v1056 = vunpack.c.l.b16 %v320
    %v1057 = vunpack.c.h.b16 %v320
    %v1058 = vunpack.c.l.b16 %v321
    %v1059 = vunpack.c.h.b16 %v321
    %v1060 = vunpack.c.l.b16 %v322
    %v1061 = vunpack.c.h.b16 %v322
    %v1062 = vunpack.c.l.b16 %v323
    %v1063 = vunpack.c.h.b16 %v323
    %v1064 = vunpack.c.l.b16 %v324
    %v1065 = vunpack.c.h.b16 %v324
    %v1066 = vunpack.c.l.b16 %v325
    %v1067 = vunpack.c.h.b16 %v325
    %v1068 = vunpack.c.l.b16 %v326
    %v1069 = vunpack.c.h.b16 %v326
    %v1070 = vunpack.c.l.b16 %v327
    %v1071 = vunpack.c.h.b16 %v327
    %v1072 = vunpack.c.l.b16 %v328
    %v1073 = vunpack.c.h.b16 %v328
    %v1074 = vunpack.c.l.b16 %v329
    %v1075 = vunpack.c.h.b16 %v329
    %v1076 = vunpack.c.l.b16 %v330
    %v1077 = vunpack.c.h.b16 %v330
    %v1078 = vunpack.c.l.b16 %v331
    %v1079 = vunpack.c.h.b16 %v331
    %v1080 = vunpack.c.l.b16 %v332
    %v1081 = vunpack.c.h.b16 %v332
    %v1082 = vunpack.c.l.b16 %v333
    %v1083 = vunpack.c.h.b16 %v333
    %v1084 = vunpack.c.l.b16 %v334
    %v1085 = vunpack.c.h.b16 %v334
    %v1086 = vunpack.c.l.b16 %v335
    %v1087 = vunpack.c.h.b16 %v335
    %v1088 = vunpack.c.l.b16 %v336
    %v1089 = vunpack.c.h.b16 %v336
    %v1090 = vunpack.c.l.b16 %v337
    %v1091 = vunpack.c.h.b16 %v337
    %v1092 = vunpack.c.l.b16 %v338
    %v1093 = vunpack.c.h.b16 %v338
    %v1094 = vunpack.c.l.b16 %v339
    %v1095 = vunpack.c.h.b16 %v339
    %v1096 = vunpack.c.l.b16 %v340
    %v1097 = vunpack.c.h.b16 %v340
    %v1098 = vunpack.c.l.b16 %v341
    %v1099 = vunpack.c.h.b16 %v341
    %v1100 = vunpack.c.l.b16 %v342
    %v1101 = vunpack.c.h.b16 %v342
    %v1102 = vunpack.c.l.b16 %v343
    %v1103 = vunpack.c.h.b16 %v343
    %v1104 = vunpack.c.l.b16 %v344
    %v1105 = vunpack.c.h.b16 %v344
    %v1106 = vunpack.c.l.b16 %v345
    %v1107 = vunpack.c.h.b16 %v345
    %v1108 = vunpack.c.l.b16 %v346
    %v1109 = vunpack.c.h.b16 %v346
    %v1110 = vunpack.c.l.b16 %v347
    %v1111 = vunpack.c.h.b16 %v347
    %v1112 = vunpack.c.l.b16 %v348
    %v1113 = vunpack.c.h.b16 %v348
    %v1114 = vunpack.c.l.b16 %v349
    %v1115 = vunpack.c.h.b16 %v349
    %v1116 = vunpack.c.l.b16 %v350
    %v1117 = vunpack.c.h.b16 %v350
    %v1118 = vunpack.c.l.b16 %v351
    %v1119 = vunpack.c.h.b16 %v351
    %v1120 = vunpack.c.l.b16 %v352
    %v1121 = vunpack.c.h.b16 %v352
    %v1122 = vunpack.c.l.b16 %v353
    %v1123 = vunpack.c.h.b16 %v353
    %v1124 = vunpack.c.l.b16 %v354
    %v1125 = vunpack.c.h.b16 %v354
    %v1126 = vunpack.c.l.b16 %v355
    %v1127 = vunpack.c.h.b16 %v355
    %v1128 = vunpack.c.l.b16 %v356
    %v1129 = vunpack.c.h.b16 %v356
    %v1130 = vunpack.c.l.b16 %v357
    %v1131 = vunpack.c.h.b16 %v357
    %v1132 = vunpack.c.l.b16 %v358
    %v1133 = vunpack.c.h.b16 %v358
    %v1134 = vunpack.c.l.b16 %v359
    %v1135 = vunpack.c.h.b16 %v359
    %v1136 = vunpack.c.l.b16 %v360
    %v1137 = vunpack.c.h.b16 %v360
    %v1138 = vunpack.c.l.b16 %v361
    %v1139 = vunpack.c.h.b16 %v361
    %v1140 = vunpack.c.l.b16 %v362
    %v1141 = vunpack.c.h.b16 %v362
    %v1142 = vunpack.c.l.b16 %v363
    %v1143 = vunpack.c.h.b16 %v363
    %v1144 = vunpack.c.l.b16 %v364
    %v1145 = vunpack.c.h.b16 %v364
    %v1146 = vunpack.c.l.b16 %v365
    %v1147 = vunpack.c.h.b16 %v365
    %v1148 = vunpack.c.l.b16 %v366
    %v1149 = vunpack.c.h.b16 %v366
    %v1150 = vunpack.c.l.b16 %v367
    %v1151 = vunpack.c.h.b16 %v367
    %v1152 = vunpack.c.l.b16 %v368
    %v1153 = vunpack.c.h.b16 %v368
    %v1154 = vunpack.c.l.b16 %v369
    %v1155 = vunpack.c.h.b16 %v369
    %v1156 = vunpack.c.l.b16 %v370
    %v1157 = vunpack.c.h.b16 %v370
    %v1158 = vunpack.c.l.b16 %v371
    %v1159 = vunpack.c.h.b16 %v371
    %v1160 = vunpack.c.l.b16 %v372
    %v1161 = vunpack.c.h.b16 %v372
    %v1162 = vunpack.c.l.b16 %v373
    %v1163 = vunpack.c.h.b16 %v373
    %v1164 = vpack.c.b16 %v656, %v652
    %v1165 = vpack.c.b16 %v657, %v653
    %v1166 = vpack.c.b16 %v658, %v654
    %v1167 = vpack.c.b16 %v659, %v655
    %v1168 = vpack.c.b16 %v664, %v660
    %v1169 = vpack.c.b16 %v665, %v661
    %v1170 = vpack.c.b16 %v666, %v662
    %v1171 = vpack.c.b16 %v667, %v663
    %v1172 = vpack.c.b16 %v672, %v668
    %v1173 = vpack.c.b16 %v673, %v669
    %v1174 = vpack.c.b16 %v674, %v670
    %v1175 = vpack.c.b16 %v675, %v671
    %v1176 = vpack.c.b16 %v680, %v676
    %v1177 = vpack.c.b16 %v681, %v677
    %v1178 = vpack.c.b16 %v682, %v678
    %v1179 = vpack.c.b16 %v683, %v679
    %v1180 = vpack.c.b16 %v688, %v684
    %v1181 = vpack.c.b16 %v689, %v685
    %v1182 = vpack.c.b16 %v690, %v686
    %v1183 = vpack.c.b16 %v691, %v687
    %v1184 = vpack.c.b16 %v696, %v692
    %v1185 = vpack.c.b16 %v697, %v693
    %v1186 = vpack.c.b16 %v698, %v694
    %v1187 = vpack.c.b16 %v699, %v695
    %v1188 = vpack.c.b16 %v704, %v700
    %v1189 = vpack.c.b16 %v705, %v701
    %v1190 = vpack.c.b16 %v706, %v702
    %v1191 = vpack.c.b16 %v707, %v703
    %v1192 = vpack.c.b16 %v712, %v708
    %v1193 = vpack.c.b16 %v713, %v709
    %v1194 = vpack.c.b16 %v714, %v710
    %v1195 = vpack.c.b16 %v715, %v711
    %v1196 = vpack.c.b16 %v720, %v716
    %v1197 = vpack.c.b16 %v721, %v717
    %v1198 = vpack.c.b16 %v722, %v718
    %v1199 = vpack.c.b16 %v723, %v719
    %v1200 = vpack.c.b16 %v728, %v724
    %v1201 = vpack.c.b16 %v729, %v725
    %v1202 = vpack.c.b16 %v730, %v726
    %v1203 = vpack.c.b16 %v731, %v727
    %v1204 = vpack.c.b16 %v736, %v732
    %v1205 = vpack.c.b16 %v737, %v733
    %v1206 = vpack.c.b16 %v738, %v734
    %v1207 = vpack.c.b16 %v739, %v735
    %v1208 = vpack.c.b16 %v744, %v740
    %v1209 = vpack.c.b16 %v745, %v741
    %v1210 = vpack.c.b16 %v746, %v742
    %v1211 = vpack.c.b16 %v747, %v743
    %v1212 = vpack.c.b16 %v752, %v748
    %v1213 = vpack.c.b16 %v753, %v749
    %v1214 = vpack.c.b16 %v754, %v750
    %v1215 = vpack.c.b16 %v755, %v751
    %v1216 = vpack.c.b16 %v760, %v756
    %v1217 = vpack.c.b16 %v761, %v757
    %v1218 = vpack.c.b16 %v762, %v758
    %v1219 = vpack.c.b16 %v763, %v759
    %v1220 = vpack.c.b16 %v768, %v764
    %v1221 = vpack.c.b16 %v769, %v765
    %v1222 = vpack.c.b16 %v770, %v766
    %v1223 = vpack.c.b16 %v771, %v767
    %v1224 = vpack.c.b16 %v776, %v772
    %v1225 = vpack.c.b16 %v777, %v773
    %v1226 = vpack.c.b16 %v778, %v774
    %v1227 = vpack.c.b16 %v779, %v775
    %v1228 = vpack.c.b16 %v784, %v780
    %v1229 = vpack.c.b16 %v785, %v781
    %v1230 = vpack.c.b16 %v786, %v782
    %v1231 = vpack.c.b16 %v787, %v783
    %v1232 = vpack.c.b16 %v792, %v788
    %v1233 = vpack.c.b16 %v793, %v789
    %v1234 = vpack.c.b16 %v794, %v790
    %v1235 = vpack.c.b16 %v795, %v791
    %v1236 = vpack.c.b16 %v800, %v796
    %v1237 = vpack.c.b16 %v801, %v797
    %v1238 = vpack.c.b16 %v802, %v798
    %v1239 = vpack.c.b16 %v803, %v799
    %v1240 = vpack.c.b16 %v808, %v804
    %v1241 = vpack.c.b16 %v809, %v805
    %v1242 = vpack.c.b16 %v810, %v806
    %v1243 = vpack.c.b16 %v811, %v807
    %v1244 = vpack.c.b16 %v816, %v812
    %v1245 = vpack.c.b16 %v817, %v813
    %v1246 = vpack.c.b16 %v818, %v814
    %v1247 = vpack.c.b16 %v819, %v815
    %v1248 = vpack.c.b16 %v824, %v820
    %v1249 = vpack.c.b16 %v825, %v821
    %v1250 = vpack.c.b16 %v826, %v822
    %v1251 = vpack.c.b16 %v827, %v823
    %v1252 = vpack.c.b16 %v832, %v828
    %v1253 = vpack.c.b16 %v833, %v829
    %v1254 = vpack.c.b16 %v834, %v830
    %v1255 = vpack.c.b16 %v835, %v831
    %v1256 = vpack.c.b16 %v840, %v836
    %v1257 = vpack.c.b16 %v841, %v837
    %v1258 = vpack.c.b16 %v842, %v838
    %v1259 = vpack.c.b16 %v843, %v839
    %v1260 = vpack.c.b16 %v848, %v844
    %v1261 = vpack.c.b16 %v849, %v845
    %v1262 = vpack.c.b16 %v850, %v846
    %v1263 = vpack.c.b16 %v851, %v847
    %v1264 = vpack.c.b16 %v856, %v852
    %v1265 = vpack.c.b16 %v857, %v853
    %v1266 = vpack.c.b16 %v858, %v854
    %v1267 = vpack.c.b16 %v859, %v855
    %v1268 = vpack.c.b16 %v864, %v860
    %v1269 = vpack.c.b16 %v865, %v861
    %v1270 = vpack.c.b16 %v866, %v862
    %v1271 = vpack.c.b16 %v867, %v863
    %v1272 = vpack.c.b16 %v872, %v868
    %v1273 = vpack.c.b16 %v873, %v869
    %v1274 = vpack.c.b16 %v874, %v870
    %v1275 = vpack.c.b16 %v875, %v871
    %v1276 = vpack.c.b16 %v880, %v876
    %v1277 = vpack.c.b16 %v881, %v877
    %v1278 = vpack.c.b16 %v882, %v878
    %v1279 = vpack.c.b16 %v883, %v879
    %v1280 = vpack.c.b16 %v888, %v884
    %v1281 = vpack.c.b16 %v889, %v885
    %v1282 = vpack.c.b16 %v890, %v886
    %v1283 = vpack.c.b16 %v891, %v887
    %v1284 = vpack.c.b16 %v896, %v892
    %v1285 = vpack.c.b16 %v897, %v893
    %v1286 = vpack.c.b16 %v898, %v894
    %v1287 = vpack.c.b16 %v899, %v895
    %v1288 = vpack.c.b16 %v904, %v900
    %v1289 = vpack.c.b16 %v905, %v901
    %v1290 = vpack.c.b16 %v906, %v902
    %v1291 = vpack.c.b16 %v907, %v903
    %v1292 = vpack.c.b16 %v912, %v908
    %v1293 = vpack.c.b16 %v913, %v909
    %v1294 = vpack.c.b16 %v914, %v910
    %v1295 = vpack.c.b16 %v915, %v911
    %v1296 = vpack.c.b16 %v920, %v916
    %v1297 = vpack.c.b16 %v921, %v917
    %v1298 = vpack.c.b16 %v922, %v918
    %v1299 = vpack.c.b16 %v923, %v919
    %v1300 = vpack.c.b16 %v928, %v924
    %v1301 = vpack.c.b16 %v929, %v925
    %v1302 = vpack.c.b16 %v930, %v926
    %v1303 = vpack.c.b16 %v931, %v927
    %v1304 = vpack.c.b16 %v936, %v932
    %v1305 = vpack.c.b16 %v937, %v933
    %v1306 = vpack.c.b16 %v938, %v934
    %v1307 = vpack.c.b16 %v939, %v935
    %v1308 = vpack.c.b16 %v944, %v940
    %v1309 = vpack.c.b16 %v945, %v941
    %v1310 = vpack.c.b16 %v946, %v942
    %v1311 = vpack.c.b16 %v947, %v943
    %v1312 = vpack.c.b16 %v952, %v948
    %v1313 = vpack.c.b16 %v953, %v949
    %v1314 = vpack.c.b16 %v954, %v950
    %v1315 = vpack.c.b16 %v955, %v951
    %v1316 = vpack.c.b16 %v960, %v956
    %v1317 = vpack.c.b16 %v961, %v957
    %v1318 = vpack.c.b16 %v962, %v958
    %v1319 = vpack.c.b16 %v963, %v959
    %v1320 = vpack.c.b16 %v968, %v964
    %v1321 = vpack.c.b16 %v969, %v965
    %v1322 = vpack.c.b16 %v970, %v966
    %v1323 = vpack.c.b16 %v971, %v967
    %v1324 = vpack.c.b16 %v976, %v972
    %v1325 = vpack.c.b16 %v977, %v973
    %v1326 = vpack.c.b16 %v978, %v974
    %v1327 = vpack.c.b16 %v979, %v975
    %v1328 = vpack.c.b16 %v984, %v980
    %v1329 = vpack.c.b16 %v985, %v981
    %v1330 = vpack.c.b16 %v986, %v982
    %v1331 = vpack.c.b16 %v987, %v983
    %v1332 = vpack.c.b16 %v992, %v988
    %v1333 = vpack.c.b16 %v993, %v989
    %v1334 = vpack.c.b16 %v994, %v990
    %v1335 = vpack.c.b16 %v995, %v991
    %v1336 = vpack.c.b16 %v1000, %v996
    %v1337 = vpack.c.b16 %v1001, %v997
    %v1338 = vpack.c.b16 %v1002, %v998
    %v1339 = vpack.c.b16 %v1003, %v999
    %v1340 = vpack.c.b16 %v1008, %v1004
    %v1341 = vpack.c.b16 %v1009, %v1005
    %v1342 = vpack.c.b16 %v1010, %v1006
    %v1343 = vpack.c.b16 %v1011, %v1007
    %v1344 = vpack.c.b16 %v1016, %v1012
    %v1345 = vpack.c.b16 %v1017, %v1013
    %v1346 = vpack.c.b16 %v1018, %v1014
    %v1347 = vpack.c.b16 %v1019, %v1015
    %v1348 = vpack.c.b16 %v1024, %v1020
    %v1349 = vpack.c.b16 %v1025, %v1021
    %v1350 = vpack.c.b16 %v1026, %v1022
    %v1351 = vpack.c.b16 %v1027, %v1023
    %v1352 = vpack.c.b16 %v1032, %v1028
    %v1353 = vpack.c.b16 %v1033, %v1029
    %v1354 = vpack.c.b16 %v1034, %v1030
    %v1355 = vpack.c.b16 %v1035, %v1031
    %v1356 = vpack.c.b16 %v1040, %v1036
    %v1357 = vpack.c.b16 %v1041, %v1037
    %v1358 = vpack.c.b16 %v1042, %v1038
    %v1359 = vpack.c.b16 %v1043, %v1039
    %v1360 = vpack.c.b16 %v1048, %v1044
    %v1361 = vpack.c.b16 %v1049, %v1045
    %v1362 = vpack.c.b16 %v1050, %v1046
    %v1363 = vpack.c.b16 %v1051, %v1047
    %v1364 = vpack.c.b16 %v1056, %v1052
    %v1365 = vpack.c.b16 %v1057, %v1053
    %v1366 = vpack.c.b16 %v1058, %v1054
    %v1367 = vpack.c.b16 %v1059, %v1055
    %v1368 = vpack.c.b16 %v1064, %v1060
    %v1369 = vpack.c.b16 %v1065, %v1061
    %v1370 = vpack.c.b16 %v1066, %v1062
    %v1371 = vpack.c.b16 %v1067, %v1063
    %v1372 = vpack.c.b16 %v1072, %v1068
    %v1373 = vpack.c.b16 %v1073, %v1069
    %v1374 = vpack.c.b16 %v1074, %v1070
    %v1375 = vpack.c.b16 %v1075, %v1071
    %v1376 = vpack.c.b16 %v1080, %v1076
    %v1377 = vpack.c.b16 %v1081, %v1077
    %v1378 = vpack.c.b16 %v1082, %v1078
    %v1379 = vpack.c.b16 %v1083, %v1079
    %v1380 = vpack.c.b16 %v1088, %v1084
    %v1381 = vpack.c.b16 %v1089, %v1085
    %v1382 = vpack.c.b16 %v1090, %v1086
    %v1383 = vpack.c.b16 %v1091, %v1087
    %v1384 = vpack.c.b16 %v1096, %v1092
    %v1385 = vpack.c.b16 %v1097, %v1093
    %v1386 = vpack.c.b16 %v1098, %v1094
    %v1387 = vpack.c.b16 %v1099, %v1095
    %v1388 = vpack.c.b16 %v1104, %v1100
    %v1389 = vpack.c.b16 %v1105, %v1101
    %v1390 = vpack.c.b16 %v1106, %v1102
    %v1391 = vpack.c.b16 %v1107, %v1103
    %v1392 = vpack.c.b16 %v1112, %v1108
    %v1393 = vpack.c.b16 %v1113, %v1109
    %v1394 = vpack.c.b16 %v1114, %v1110
    %v1395 = vpack.c.b16 %v1115, %v1111
    %v1396 = vpack.c.b16 %v1120, %v1116
    %v1397 = vpack.c.b16 %v1121, %v1117
    %v1398 = vpack.c.b16 %v1122, %v1118
    %v1399 = vpack.c.b16 %v1123, %v1119
    %v1400 = vpack.c.b16 %v1128, %v1124
    %v1401 = vpack.c.b16 %v1129, %v1125
    %v1402 = vpack.c.b16 %v1130, %v1126
    %v1403 = vpack.c.b16 %v1131, %v1127
    %v1404 = vpack.c.b16 %v1136, %v1132
    %v1405 = vpack.c.b16 %v1137, %v1133
    %v1406 = vpack.c.b16 %v1138, %v1134
    %v1407 = vpack.c.b16 %v1139, %v1135
    %v1408 = vpack.c.b16 %v1144, %v1140
    %v1409 = vpack.c.b16 %v1145, %v1141
    %v1410 = vpack.c.b16 %v1146, %v1142
    %v1411 = vpack.c.b16 %v1147, %v1143
    %v1412 = vpack.c.b16 %v1152, %v1148
    %v1413 = vpack.c.b16 %v1153, %v1149
    %v1414 = vpack.c.b16 %v1154, %v1150
    %v1415 = vpack.c.b16 %v1155, %v1151
    %v1416 = vpack.c.b16 %v1160, %v1156
    %v1417 = vpack.c.b16 %v1161, %v1157
    %v1418 = vpack.c.b16 %v1162, %v1158
    %v1419 = vpack.c.b16 %v1163, %v1159
    %1676 = vmatprep.subr.bf16.mxu0 %v1193
    %1677 = vmatpush1.bf16.msra.mxu0 %v1192
    %1678 = vmatprep.subr.bf16.mxu0 %v1189
    %1679 = vmatpush1.bf16.msra.mxu0 %v1188
    %1680 = vmatprep.subr.bf16.mxu0 %v1185
    %1681 = vmatpush1.bf16.msra.mxu0 %v1184
    %1682 = vmatprep.subr.bf16.mxu0 %v1181
    %1683 = vmatpush1.bf16.msra.mxu0 %v1180
    %1684 = vmatprep.subr.bf16.mxu0 %v1177
    %1685 = vmatpush1.bf16.msra.mxu0 %v1176
    %1686 = vmatprep.subr.bf16.mxu0 %v1173
    %1687 = vmatpush1.bf16.msra.mxu0 %v1172
    %1688 = vmatprep.subr.bf16.mxu0 %v1169
    %1689 = vmatpush1.bf16.msra.mxu0 %v1168
    %1690 = vmatprep.subr.bf16.mxu0 %v1165
    %1691 = vmatpush1.bf16.msra.mxu0 %v1164
    %1692 = vmatprep.subr.bf16.mxu0 %v1225
    %1693 = vmatpush2.bf16.msra.mxu0 %v1224
    %1694 = vmatprep.subr.bf16.mxu0 %v1221
    %1695 = vmatpush2.bf16.msra.mxu0 %v1220
    %1696 = vmatprep.subr.bf16.mxu0 %v1217
    %1697 = vmatpush2.bf16.msra.mxu0 %v1216
    %1698 = vmatprep.subr.bf16.mxu0 %v1213
    %1699 = vmatpush2.bf16.msra.mxu0 %v1212
    %1700 = vmatprep.subr.bf16.mxu0 %v1209
    %1701 = vmatpush2.bf16.msra.mxu0 %v1208
    %1702 = vmatprep.subr.bf16.mxu0 %v1205
    %1703 = vmatpush2.bf16.msra.mxu0 %v1204
    %1704 = vmatprep.subr.bf16.mxu0 %v1201
    %1705 = vmatpush2.bf16.msra.mxu0 %v1200
    %1706 = vmatprep.subr.bf16.mxu0 %v1197
    %1707 = vmatpush2.bf16.msra.mxu0 %v1196
    %1708 = vmatprep.mubr.bf16.mxu0 %v111
    %1709 = vmatmul.mubr.bf16.gmra.mxu0 %v110
    %v1710 = vpop.f32.mrf.mxu0
    %v1711 = vadd.f32 %v379, %v1710
    %v1712 = vpop.f32.mrf.mxu0
    %v1713 = vadd.f32 %v383, %v1712
    %v1714 = vpop.f32.mrf.mxu0
    %v1715 = vadd.f32 %v379, %v1714
    %v1716 = vpop.f32.mrf.mxu0
    %v1717 = vadd.f32 %v383, %v1716
    %1718 = vdwg.mxu0
    %1719 = vmatprep.subr.bf16.mxu0 %v1257
    %1720 = vmatpush1.bf16.msra.mxu0 %v1256
    %1721 = vmatprep.subr.bf16.mxu0 %v1253
    %1722 = vmatpush1.bf16.msra.mxu0 %v1252
    %1723 = vmatprep.subr.bf16.mxu0 %v1249
    %1724 = vmatpush1.bf16.msra.mxu0 %v1248
    %1725 = vmatprep.subr.bf16.mxu0 %v1245
    %1726 = vmatpush1.bf16.msra.mxu0 %v1244
    %1727 = vmatprep.subr.bf16.mxu0 %v1241
    %1728 = vmatpush1.bf16.msra.mxu0 %v1240
    %1729 = vmatprep.subr.bf16.mxu0 %v1237
    %1730 = vmatpush1.bf16.msra.mxu0 %v1236
    %1731 = vmatprep.subr.bf16.mxu0 %v1233
    %1732 = vmatpush1.bf16.msra.mxu0 %v1232
    %1733 = vmatprep.subr.bf16.mxu0 %v1229
    %1734 = vmatpush1.bf16.msra.mxu0 %v1228
    %1735 = vmatprep.subr.bf16.mxu0 %v1289
    %1736 = vmatpush2.bf16.msra.mxu0 %v1288
    %1737 = vmatprep.subr.bf16.mxu0 %v1285
    %1738 = vmatpush2.bf16.msra.mxu0 %v1284
    %1739 = vmatprep.subr.bf16.mxu0 %v1281
    %1740 = vmatpush2.bf16.msra.mxu0 %v1280
    %1741 = vmatprep.subr.bf16.mxu0 %v1277
    %1742 = vmatpush2.bf16.msra.mxu0 %v1276
    %1743 = vmatprep.subr.bf16.mxu0 %v1273
    %1744 = vmatpush2.bf16.msra.mxu0 %v1272
    %1745 = vmatprep.subr.bf16.mxu0 %v1269
    %1746 = vmatpush2.bf16.msra.mxu0 %v1268
    %1747 = vmatprep.subr.bf16.mxu0 %v1265
    %1748 = vmatpush2.bf16.msra.mxu0 %v1264
    %1749 = vmatprep.subr.bf16.mxu0 %v1261
    %1750 = vmatpush2.bf16.msra.mxu0 %v1260
    %1751 = vmatprep.mubr.bf16.mxu0 %v113
    %1752 = vmatmul.mubr.bf16.gmra.mxu0 %v112
    %v1753 = vpop.f32.mrf.mxu0
    %v1754 = vadd.f32 %v1711, %v1753
    %v1755 = vpop.f32.mrf.mxu0
    %v1756 = vadd.f32 %v1713, %v1755
    %v1757 = vpop.f32.mrf.mxu0
    %v1758 = vadd.f32 %v1715, %v1757
    %v1759 = vpop.f32.mrf.mxu0
    %v1760 = vadd.f32 %v1717, %v1759
    %1761 = vdwg.mxu0
    %1762 = vmatprep.subr.bf16.mxu0 %v1321
    %1763 = vmatpush1.bf16.msra.mxu0 %v1320
    %1764 = vmatprep.subr.bf16.mxu0 %v1317
    %1765 = vmatpush1.bf16.msra.mxu0 %v1316
    %1766 = vmatprep.subr.bf16.mxu0 %v1313
    %1767 = vmatpush1.bf16.msra.mxu0 %v1312
    %1768 = vmatprep.subr.bf16.mxu0 %v1309
    %1769 = vmatpush1.bf16.msra.mxu0 %v1308
    %1770 = vmatprep.subr.bf16.mxu0 %v1305
    %1771 = vmatpush1.bf16.msra.mxu0 %v1304
    %1772 = vmatprep.subr.bf16.mxu0 %v1301
    %1773 = vmatpush1.bf16.msra.mxu0 %v1300
    %1774 = vmatprep.subr.bf16.mxu0 %v1297
    %1775 = vmatpush1.bf16.msra.mxu0 %v1296
    %1776 = vmatprep.subr.bf16.mxu0 %v1293
    %1777 = vmatpush1.bf16.msra.mxu0 %v1292
    %1778 = vmatprep.subr.bf16.mxu0 %v1353
    %1779 = vmatpush2.bf16.msra.mxu0 %v1352
    %1780 = vmatprep.subr.bf16.mxu0 %v1349
    %1781 = vmatpush2.bf16.msra.mxu0 %v1348
    %1782 = vmatprep.subr.bf16.mxu0 %v1345
    %1783 = vmatpush2.bf16.msra.mxu0 %v1344
    %1784 = vmatprep.subr.bf16.mxu0 %v1341
    %1785 = vmatpush2.bf16.msra.mxu0 %v1340
    %1786 = vmatprep.subr.bf16.mxu0 %v1337
    %1787 = vmatpush2.bf16.msra.mxu0 %v1336
    %1788 = vmatprep.subr.bf16.mxu0 %v1333
    %1789 = vmatpush2.bf16.msra.mxu0 %v1332
    %1790 = vmatprep.subr.bf16.mxu0 %v1329
    %1791 = vmatpush2.bf16.msra.mxu0 %v1328
    %1792 = vmatprep.subr.bf16.mxu0 %v1325
    %1793 = vmatpush2.bf16.msra.mxu0 %v1324
    %1794 = vmatprep.mubr.bf16.mxu0 %v115
    %1795 = vmatmul.mubr.bf16.gmra.mxu0 %v114
    %v1796 = vpop.f32.mrf.mxu0
    %v1797 = vadd.f32 %v1754, %v1796
    %v1798 = vpop.f32.mrf.mxu0
    %v1799 = vadd.f32 %v1756, %v1798
    %v1800 = vpop.f32.mrf.mxu0
    %v1801 = vadd.f32 %v1758, %v1800
    %v1802 = vpop.f32.mrf.mxu0
    %v1803 = vadd.f32 %v1760, %v1802
    %1804 = vdwg.mxu0
    %1805 = vmatprep.subr.bf16.mxu0 %v1385
    %1806 = vmatpush1.bf16.msra.mxu0 %v1384
    %1807 = vmatprep.subr.bf16.mxu0 %v1381
    %1808 = vmatpush1.bf16.msra.mxu0 %v1380
    %1809 = vmatprep.subr.bf16.mxu0 %v1377
    %1810 = vmatpush1.bf16.msra.mxu0 %v1376
    %1811 = vmatprep.subr.bf16.mxu0 %v1373
    %1812 = vmatpush1.bf16.msra.mxu0 %v1372
    %1813 = vmatprep.subr.bf16.mxu0 %v1369
    %1814 = vmatpush1.bf16.msra.mxu0 %v1368
    %1815 = vmatprep.subr.bf16.mxu0 %v1365
    %1816 = vmatpush1.bf16.msra.mxu0 %v1364
    %1817 = vmatprep.subr.bf16.mxu0 %v1361
    %1818 = vmatpush1.bf16.msra.mxu0 %v1360
    %1819 = vmatprep.subr.bf16.mxu0 %v1357
    %1820 = vmatpush1.bf16.msra.mxu0 %v1356
    %1821 = vmatprep.subr.bf16.mxu0 %v1417
    %1822 = vmatpush2.bf16.msra.mxu0 %v1416
    %1823 = vmatprep.subr.bf16.mxu0 %v1413
    %1824 = vmatpush2.bf16.msra.mxu0 %v1412
    %1825 = vmatprep.subr.bf16.mxu0 %v1409
    %1826 = vmatpush2.bf16.msra.mxu0 %v1408
    %1827 = vmatprep.subr.bf16.mxu0 %v1405
    %1828 = vmatpush2.bf16.msra.mxu0 %v1404
    %1829 = vmatprep.subr.bf16.mxu0 %v1401
    %1830 = vmatpush2.bf16.msra.mxu0 %v1400
    %1831 = vmatprep.subr.bf16.mxu0 %v1397
    %1832 = vmatpush2.bf16.msra.mxu0 %v1396
    %1833 = vmatprep.subr.bf16.mxu0 %v1393
    %1834 = vmatpush2.bf16.msra.mxu0 %v1392
    %1835 = vmatprep.subr.bf16.mxu0 %v1389
    %1836 = vmatpush2.bf16.msra.mxu0 %v1388
    %1837 = vmatprep.mubr.bf16.mxu0 %v117
    %1838 = vmatmul.mubr.bf16.gmra.mxu0 %v116
    %v1839 = vpop.f32.mrf.mxu0
    %v1840 = vadd.f32 %v1797, %v1839
    %v1841 = vpop.f32.mrf.mxu0
    %v1842 = vadd.f32 %v1799, %v1841
    %v1843 = vpop.f32.mrf.mxu0
    %v1844 = vadd.f32 %v1801, %v1843
    %v1845 = vpop.f32.mrf.mxu0
    %v1846 = vadd.f32 %v1803, %v1845
    %1847 = vdwg.mxu0
    %1848 = vmatprep.subr.bf16.mxu0 %v1195
    %1849 = vmatpush1.bf16.msra.mxu0 %v1194
    %1850 = vmatprep.subr.bf16.mxu0 %v1191
    %1851 = vmatpush1.bf16.msra.mxu0 %v1190
    %1852 = vmatprep.subr.bf16.mxu0 %v1187
    %1853 = vmatpush1.bf16.msra.mxu0 %v1186
    %1854 = vmatprep.subr.bf16.mxu0 %v1183
    %1855 = vmatpush1.bf16.msra.mxu0 %v1182
    %1856 = vmatprep.subr.bf16.mxu0 %v1179
    %1857 = vmatpush1.bf16.msra.mxu0 %v1178
    %1858 = vmatprep.subr.bf16.mxu0 %v1175
    %1859 = vmatpush1.bf16.msra.mxu0 %v1174
    %1860 = vmatprep.subr.bf16.mxu0 %v1171
    %1861 = vmatpush1.bf16.msra.mxu0 %v1170
    %1862 = vmatprep.subr.bf16.mxu0 %v1167
    %1863 = vmatpush1.bf16.msra.mxu0 %v1166
    %1864 = vmatprep.subr.bf16.mxu0 %v1227
    %1865 = vmatpush2.bf16.msra.mxu0 %v1226
    %1866 = vmatprep.subr.bf16.mxu0 %v1223
    %1867 = vmatpush2.bf16.msra.mxu0 %v1222
    %1868 = vmatprep.subr.bf16.mxu0 %v1219
    %1869 = vmatpush2.bf16.msra.mxu0 %v1218
    %1870 = vmatprep.subr.bf16.mxu0 %v1215
    %1871 = vmatpush2.bf16.msra.mxu0 %v1214
    %1872 = vmatprep.subr.bf16.mxu0 %v1211
    %1873 = vmatpush2.bf16.msra.mxu0 %v1210
    %1874 = vmatprep.subr.bf16.mxu0 %v1207
    %1875 = vmatpush2.bf16.msra.mxu0 %v1206
    %1876 = vmatprep.subr.bf16.mxu0 %v1203
    %1877 = vmatpush2.bf16.msra.mxu0 %v1202
    %1878 = vmatprep.subr.bf16.mxu0 %v1199
    %1879 = vmatpush2.bf16.msra.mxu0 %v1198
    %1880 = vmatprep.mubr.bf16.mxu0 %v111
    %1881 = vmatmul.mubr.bf16.gmra.mxu0 %v110
    %v1882 = vpop.f32.mrf.mxu0
    %v1883 = vadd.f32 %v387, %v1882
    %v1884 = vpop.f32.mrf.mxu0
    %v1885 = vadd.f32 %v391, %v1884
    %v1886 = vpop.f32.mrf.mxu0
    %v1887 = vadd.f32 %v387, %v1886
    %v1888 = vpop.f32.mrf.mxu0
    %v1889 = vadd.f32 %v391, %v1888
    %1890 = vdwg.mxu0
    %1891 = vmatprep.subr.bf16.mxu0 %v1259
    %1892 = vmatpush1.bf16.msra.mxu0 %v1258
    %1893 = vmatprep.subr.bf16.mxu0 %v1255
    %1894 = vmatpush1.bf16.msra.mxu0 %v1254
    %1895 = vmatprep.subr.bf16.mxu0 %v1251
    %1896 = vmatpush1.bf16.msra.mxu0 %v1250
    %1897 = vmatprep.subr.bf16.mxu0 %v1247
    %1898 = vmatpush1.bf16.msra.mxu0 %v1246
    %1899 = vmatprep.subr.bf16.mxu0 %v1243
    %1900 = vmatpush1.bf16.msra.mxu0 %v1242
    %1901 = vmatprep.subr.bf16.mxu0 %v1239
    %1902 = vmatpush1.bf16.msra.mxu0 %v1238
    %1903 = vmatprep.subr.bf16.mxu0 %v1235
    %1904 = vmatpush1.bf16.msra.mxu0 %v1234
    %1905 = vmatprep.subr.bf16.mxu0 %v1231
    %1906 = vmatpush1.bf16.msra.mxu0 %v1230
    %1907 = vmatprep.subr.bf16.mxu0 %v1291
    %1908 = vmatpush2.bf16.msra.mxu0 %v1290
    %1909 = vmatprep.subr.bf16.mxu0 %v1287
    %1910 = vmatpush2.bf16.msra.mxu0 %v1286
    %1911 = vmatprep.subr.bf16.mxu0 %v1283
    %1912 = vmatpush2.bf16.msra.mxu0 %v1282
    %1913 = vmatprep.subr.bf16.mxu0 %v1279
    %1914 = vmatpush2.bf16.msra.mxu0 %v1278
    %1915 = vmatprep.subr.bf16.mxu0 %v1275
    %1916 = vmatpush2.bf16.msra.mxu0 %v1274
    %1917 = vmatprep.subr.bf16.mxu0 %v1271
    %1918 = vmatpush2.bf16.msra.mxu0 %v1270
    %1919 = vmatprep.subr.bf16.mxu0 %v1267
    %1920 = vmatpush2.bf16.msra.mxu0 %v1266
    %1921 = vmatprep.subr.bf16.mxu0 %v1263
    %1922 = vmatpush2.bf16.msra.mxu0 %v1262
    %1923 = vmatprep.mubr.bf16.mxu0 %v113
    %1924 = vmatmul.mubr.bf16.gmra.mxu0 %v112
    %v1925 = vpop.f32.mrf.mxu0
    %v1926 = vadd.f32 %v1883, %v1925
    %v1927 = vpop.f32.mrf.mxu0
    %v1928 = vadd.f32 %v1885, %v1927
    %v1929 = vpop.f32.mrf.mxu0
    %v1930 = vadd.f32 %v1887, %v1929
    %v1931 = vpop.f32.mrf.mxu0
    %v1932 = vadd.f32 %v1889, %v1931
    %1933 = vdwg.mxu0
    %1934 = vmatprep.subr.bf16.mxu0 %v1323
    %1935 = vmatpush1.bf16.msra.mxu0 %v1322
    %1936 = vmatprep.subr.bf16.mxu0 %v1319
    %1937 = vmatpush1.bf16.msra.mxu0 %v1318
    %1938 = vmatprep.subr.bf16.mxu0 %v1315
    %1939 = vmatpush1.bf16.msra.mxu0 %v1314
    %1940 = vmatprep.subr.bf16.mxu0 %v1311
    %1941 = vmatpush1.bf16.msra.mxu0 %v1310
    %1942 = vmatprep.subr.bf16.mxu0 %v1307
    %1943 = vmatpush1.bf16.msra.mxu0 %v1306
    %1944 = vmatprep.subr.bf16.mxu0 %v1303
    %1945 = vmatpush1.bf16.msra.mxu0 %v1302
    %1946 = vmatprep.subr.bf16.mxu0 %v1299
    %1947 = vmatpush1.bf16.msra.mxu0 %v1298
    %1948 = vmatprep.subr.bf16.mxu0 %v1295
    %1949 = vmatpush1.bf16.msra.mxu0 %v1294
    %1950 = vmatprep.subr.bf16.mxu0 %v1355
    %1951 = vmatpush2.bf16.msra.mxu0 %v1354
    %1952 = vmatprep.subr.bf16.mxu0 %v1351
    %1953 = vmatpush2.bf16.msra.mxu0 %v1350
    %1954 = vmatprep.subr.bf16.mxu0 %v1347
    %1955 = vmatpush2.bf16.msra.mxu0 %v1346
    %1956 = vmatprep.subr.bf16.mxu0 %v1343
    %1957 = vmatpush2.bf16.msra.mxu0 %v1342
    %1958 = vmatprep.subr.bf16.mxu0 %v1339
    %1959 = vmatpush2.bf16.msra.mxu0 %v1338
    %1960 = vmatprep.subr.bf16.mxu0 %v1335
    %1961 = vmatpush2.bf16.msra.mxu0 %v1334
    %1962 = vmatprep.subr.bf16.mxu0 %v1331
    %1963 = vmatpush2.bf16.msra.mxu0 %v1330
    %1964 = vmatprep.subr.bf16.mxu0 %v1327
    %1965 = vmatpush2.bf16.msra.mxu0 %v1326
    %1966 = vmatprep.mubr.bf16.mxu0 %v115
    %1967 = vmatmul.mubr.bf16.gmra.mxu0 %v114
    %v1968 = vpop.f32.mrf.mxu0
    %v1969 = vadd.f32 %v1926, %v1968
    %v1970 = vpop.f32.mrf.mxu0
    %v1971 = vadd.f32 %v1928, %v1970
    %v1972 = vpop.f32.mrf.mxu0
    %v1973 = vadd.f32 %v1930, %v1972
    %v1974 = vpop.f32.mrf.mxu0
    %v1975 = vadd.f32 %v1932, %v1974
    %1976 = vdwg.mxu0
    %1977 = vmatprep.subr.bf16.mxu0 %v1387
    %1978 = vmatpush1.bf16.msra.mxu0 %v1386
    %1979 = vmatprep.subr.bf16.mxu0 %v1383
    %1980 = vmatpush1.bf16.msra.mxu0 %v1382
    %1981 = vmatprep.subr.bf16.mxu0 %v1379
    %1982 = vmatpush1.bf16.msra.mxu0 %v1378
    %1983 = vmatprep.subr.bf16.mxu0 %v1375
    %1984 = vmatpush1.bf16.msra.mxu0 %v1374
    %1985 = vmatprep.subr.bf16.mxu0 %v1371
    %1986 = vmatpush1.bf16.msra.mxu0 %v1370
    %1987 = vmatprep.subr.bf16.mxu0 %v1367
    %1988 = vmatpush1.bf16.msra.mxu0 %v1366
    %1989 = vmatprep.subr.bf16.mxu0 %v1363
    %1990 = vmatpush1.bf16.msra.mxu0 %v1362
    %1991 = vmatprep.subr.bf16.mxu0 %v1359
    %1992 = vmatpush1.bf16.msra.mxu0 %v1358
    %1993 = vmatprep.subr.bf16.mxu0 %v1419
    %1994 = vmatpush2.bf16.msra.mxu0 %v1418
    %1995 = vmatprep.subr.bf16.mxu0 %v1415
    %1996 = vmatpush2.bf16.msra.mxu0 %v1414
    %1997 = vmatprep.subr.bf16.mxu0 %v1411
    %1998 = vmatpush2.bf16.msra.mxu0 %v1410
    %1999 = vmatprep.subr.bf16.mxu0 %v1407
    %2000 = vmatpush2.bf16.msra.mxu0 %v1406
    %2001 = vmatprep.subr.bf16.mxu0 %v1403
    %2002 = vmatpush2.bf16.msra.mxu0 %v1402
    %2003 = vmatprep.subr.bf16.mxu0 %v1399
    %2004 = vmatpush2.bf16.msra.mxu0 %v1398
    %2005 = vmatprep.subr.bf16.mxu0 %v1395
    %2006 = vmatpush2.bf16.msra.mxu0 %v1394
    %2007 = vmatprep.subr.bf16.mxu0 %v1391
    %2008 = vmatpush2.bf16.msra.mxu0 %v1390
    %2009 = vmatprep.mubr.bf16.mxu0 %v117
    %2010 = vmatmul.mubr.bf16.gmra.mxu0 %v116
    %v2011 = vpop.f32.mrf.mxu0
    %v2012 = vadd.f32 %v1969, %v2011
    %v2013 = vpop.f32.mrf.mxu0
    %v2014 = vadd.f32 %v1971, %v2013
    %v2015 = vpop.f32.mrf.mxu0
    %v2016 = vadd.f32 %v1973, %v2015
    %v2017 = vpop.f32.mrf.mxu0
    %v2018 = vadd.f32 %v1975, %v2017
    %2019 = vdwg.mxu0
    %vm2020 = vcmp.ge.f32.partialorder %v1840, 0.0
    %vm2021 = vcmp.ge.f32.partialorder %v1842, 0.0
    %vm2022 = vcmp.ge.f32.partialorder %v2012, 0.0
    %vm2023 = vcmp.ge.f32.partialorder %v2014, 0.0
    %vm2024 = vcmp.ge.f32.partialorder %v1844, 0.0
    %vm2025 = vcmp.ge.f32.partialorder %v1846, 0.0
    %vm2026 = vcmp.ge.f32.partialorder %v2016, 0.0
    %vm2027 = vcmp.ge.f32.partialorder %v2018, 0.0
    %v2028 = vmul.f32 %v1840, 0.22916667
    %v2029 = vmul.f32 %v1842, 0.22916667
    %v2030 = vmul.f32 %v2012, 0.22916667
    %v2031 = vmul.f32 %v2014, 0.22916667
    %v2032 = vmul.f32 %v1844, 0.22916667
    %v2033 = vmul.f32 %v1846, 0.22916667
    %v2034 = vmul.f32 %v2016, 0.22916667
    %v2035 = vmul.f32 %v2018, 0.22916667
    %v2036 = vsel %vm2020, %v1840, %v2028
    %v2037 = vsel %vm2021, %v1842, %v2029
    %v2038 = vsel %vm2022, %v2012, %v2030
    %v2039 = vsel %vm2023, %v2014, %v2031
    %v2040 = vsel %vm2024, %v1844, %v2032
    %v2041 = vsel %vm2025, %v1846, %v2033
    %v2042 = vsel %vm2026, %v2016, %v2034
    %v2043 = vsel %vm2027, %v2018, %v2035
    %v2044 = vpack.c.bf16 %v2040, %v2036
    %v2045 = vpack.c.bf16 %v2041, %v2037
    %v2046 = vpack.c.bf16 %v2042, %v2038
    %v2047 = vpack.c.bf16 %v2043, %v2039
    %v2048 = vld [vmem:[#allocation8] sm:$0xff]
    %v2049 = vld [vmem:[#allocation8 + $0x8] sm:$0xff]
    %v2050 = vld [vmem:[#allocation8 + $0x10] sm:$0xff]
    %v2051 = vld [vmem:[#allocation8 + $0x18] sm:$0xff]
    %v2052 = vld [vmem:[#allocation8 + $0x20] sm:$0xff]
    %v2053 = vld [vmem:[#allocation8 + $0x28] sm:$0xff]
    %v2054 = vld [vmem:[#allocation8 + $0x30] sm:$0xff]
    %v2055 = vld [vmem:[#allocation8 + $0x38] sm:$0xff]
    %v2056 = vld [vmem:[#allocation8 + $0x40] sm:$0xff]
    %v2057 = vld [vmem:[#allocation8 + $0x48] sm:$0xff]
    %v2058 = vld [vmem:[#allocation8 + $0x50] sm:$0xff]
    %v2059 = vld [vmem:[#allocation8 + $0x58] sm:$0xff]
    %v2060 = vld [vmem:[#allocation8 + $0x60] sm:$0xff]
    %v2061 = vld [vmem:[#allocation8 + $0x68] sm:$0xff]
    %v2062 = vld [vmem:[#allocation8 + $0x70] sm:$0xff]
    %v2063 = vld [vmem:[#allocation8 + $0x78] sm:$0xff]
    %v2064 = vld [vmem:[#allocation8 + $0x80] sm:$0xff]
    %v2065 = vld [vmem:[#allocation8 + $0x88] sm:$0xff]
    %v2066 = vld [vmem:[#allocation8 + $0x90] sm:$0xff]
    %v2067 = vld [vmem:[#allocation8 + $0x98] sm:$0xff]
    %v2068 = vld [vmem:[#allocation8 + $0xa0] sm:$0xff]
    %v2069 = vld [vmem:[#allocation8 + $0xa8] sm:$0xff]
    %v2070 = vld [vmem:[#allocation8 + $0xb0] sm:$0xff]
    %v2071 = vld [vmem:[#allocation8 + $0xb8] sm:$0xff]
    %v2072 = vld [vmem:[#allocation8 + $0xc0] sm:$0xff]
    %v2073 = vld [vmem:[#allocation8 + $0xc8] sm:$0xff]
    %v2074 = vld [vmem:[#allocation8 + $0xd0] sm:$0xff]
    %v2075 = vld [vmem:[#allocation8 + $0xd8] sm:$0xff]
    %v2076 = vld [vmem:[#allocation8 + $0xe0] sm:$0xff]
    %v2077 = vld [vmem:[#allocation8 + $0xe8] sm:$0xff]
    %v2078 = vld [vmem:[#allocation8 + $0xf0] sm:$0xff]
    %v2079 = vld [vmem:[#allocation8 + $0xf8] sm:$0xff]
    %v2080 = vld [vmem:[#allocation8 + $0x100] sm:$0xff]
    %v2081 = vld [vmem:[#allocation8 + $0x108] sm:$0xff]
    %v2082 = vld [vmem:[#allocation8 + $0x110] sm:$0xff]
    %v2083 = vld [vmem:[#allocation8 + $0x118] sm:$0xff]
    %v2084 = vld [vmem:[#allocation8 + $0x120] sm:$0xff]
    %v2085 = vld [vmem:[#allocation8 + $0x128] sm:$0xff]
    %v2086 = vld [vmem:[#allocation8 + $0x130] sm:$0xff]
    %v2087 = vld [vmem:[#allocation8 + $0x138] sm:$0xff]
    %v2088 = vld [vmem:[#allocation8 + $0x140] sm:$0xff]
    %v2089 = vld [vmem:[#allocation8 + $0x148] sm:$0xff]
    %v2090 = vld [vmem:[#allocation8 + $0x150] sm:$0xff]
    %v2091 = vld [vmem:[#allocation8 + $0x158] sm:$0xff]
    %v2092 = vld [vmem:[#allocation8 + $0x160] sm:$0xff]
    %v2093 = vld [vmem:[#allocation8 + $0x168] sm:$0xff]
    %v2094 = vld [vmem:[#allocation8 + $0x170] sm:$0xff]
    %v2095 = vld [vmem:[#allocation8 + $0x178] sm:$0xff]
    %v2096 = vld [vmem:[#allocation8 + $0x180] sm:$0xff]
    %v2097 = vld [vmem:[#allocation8 + $0x188] sm:$0xff]
    %v2098 = vld [vmem:[#allocation8 + $0x190] sm:$0xff]
    %v2099 = vld [vmem:[#allocation8 + $0x198] sm:$0xff]
    %v2100 = vld [vmem:[#allocation8 + $0x1a0] sm:$0xff]
    %v2101 = vld [vmem:[#allocation8 + $0x1a8] sm:$0xff]
    %v2102 = vld [vmem:[#allocation8 + $0x1b0] sm:$0xff]
    %v2103 = vld [vmem:[#allocation8 + $0x1b8] sm:$0xff]
    %v2104 = vld [vmem:[#allocation8 + $0x1c0] sm:$0xff]
    %v2105 = vld [vmem:[#allocation8 + $0x1c8] sm:$0xff]
    %v2106 = vld [vmem:[#allocation8 + $0x1d0] sm:$0xff]
    %v2107 = vld [vmem:[#allocation8 + $0x1d8] sm:$0xff]
    %v2108 = vld [vmem:[#allocation8 + $0x1e0] sm:$0xff]
    %v2109 = vld [vmem:[#allocation8 + $0x1e8] sm:$0xff]
    %v2110 = vld [vmem:[#allocation8 + $0x1f0] sm:$0xff]
    %v2111 = vld [vmem:[#allocation8 + $0x1f8] sm:$0xff]
    %v2112 = vld [vmem:[%s4] sm:$0x3]
    %v2114 = vlaneseq
    %v2115 = vshrl.u32 %v2114, 7
    %v2116 = vsub.s32 0, %v2115
    %v2117 = vrot.slane %v2112, %v2116
    %v2118 = vlaneseq
    %v2119 = vshrl.u32 %v2118, 7
    %v2120 = vsub.s32 1, %v2119
    %v2121 = vrot.slane %v2112, %v2120
    %v2188 = vunpack.c.l.b16 %v2048
    %v2189 = vunpack.c.h.b16 %v2048
    %v2190 = vunpack.c.l.b16 %v2049
    %v2191 = vunpack.c.h.b16 %v2049
    %v2192 = vunpack.c.l.b16 %v2050
    %v2193 = vunpack.c.h.b16 %v2050
    %v2194 = vunpack.c.l.b16 %v2051
    %v2195 = vunpack.c.h.b16 %v2051
    %v2196 = vunpack.c.l.b16 %v2052
    %v2197 = vunpack.c.h.b16 %v2052
    %v2198 = vunpack.c.l.b16 %v2053
    %v2199 = vunpack.c.h.b16 %v2053
    %v2200 = vunpack.c.l.b16 %v2054
    %v2201 = vunpack.c.h.b16 %v2054
    %v2202 = vunpack.c.l.b16 %v2055
    %v2203 = vunpack.c.h.b16 %v2055
    %v2204 = vunpack.c.l.b16 %v2056
    %v2205 = vunpack.c.h.b16 %v2056
    %v2206 = vunpack.c.l.b16 %v2057
    %v2207 = vunpack.c.h.b16 %v2057
    %v2208 = vunpack.c.l.b16 %v2058
    %v2209 = vunpack.c.h.b16 %v2058
    %v2210 = vunpack.c.l.b16 %v2059
    %v2211 = vunpack.c.h.b16 %v2059
    %v2212 = vunpack.c.l.b16 %v2060
    %v2213 = vunpack.c.h.b16 %v2060
    %v2214 = vunpack.c.l.b16 %v2061
    %v2215 = vunpack.c.h.b16 %v2061
    %v2216 = vunpack.c.l.b16 %v2062
    %v2217 = vunpack.c.h.b16 %v2062
    %v2218 = vunpack.c.l.b16 %v2063
    %v2219 = vunpack.c.h.b16 %v2063
    %v2220 = vunpack.c.l.b16 %v2064
    %v2221 = vunpack.c.h.b16 %v2064
    %v2222 = vunpack.c.l.b16 %v2065
    %v2223 = vunpack.c.h.b16 %v2065
    %v2224 = vunpack.c.l.b16 %v2066
    %v2225 = vunpack.c.h.b16 %v2066
    %v2226 = vunpack.c.l.b16 %v2067
    %v2227 = vunpack.c.h.b16 %v2067
    %v2228 = vunpack.c.l.b16 %v2068
    %v2229 = vunpack.c.h.b16 %v2068
    %v2230 = vunpack.c.l.b16 %v2069
    %v2231 = vunpack.c.h.b16 %v2069
    %v2232 = vunpack.c.l.b16 %v2070
    %v2233 = vunpack.c.h.b16 %v2070
    %v2234 = vunpack.c.l.b16 %v2071
    %v2235 = vunpack.c.h.b16 %v2071
    %v2236 = vunpack.c.l.b16 %v2072
    %v2237 = vunpack.c.h.b16 %v2072
    %v2238 = vunpack.c.l.b16 %v2073
    %v2239 = vunpack.c.h.b16 %v2073
    %v2240 = vunpack.c.l.b16 %v2074
    %v2241 = vunpack.c.h.b16 %v2074
    %v2242 = vunpack.c.l.b16 %v2075
    %v2243 = vunpack.c.h.b16 %v2075
    %v2244 = vunpack.c.l.b16 %v2076
    %v2245 = vunpack.c.h.b16 %v2076
    %v2246 = vunpack.c.l.b16 %v2077
    %v2247 = vunpack.c.h.b16 %v2077
    %v2248 = vunpack.c.l.b16 %v2078
    %v2249 = vunpack.c.h.b16 %v2078
    %v2250 = vunpack.c.l.b16 %v2079
    %v2251 = vunpack.c.h.b16 %v2079
    %v2252 = vunpack.c.l.b16 %v2080
    %v2253 = vunpack.c.h.b16 %v2080
    %v2254 = vunpack.c.l.b16 %v2081
    %v2255 = vunpack.c.h.b16 %v2081
    %v2256 = vunpack.c.l.b16 %v2082
    %v2257 = vunpack.c.h.b16 %v2082
    %v2258 = vunpack.c.l.b16 %v2083
    %v2259 = vunpack.c.h.b16 %v2083
    %v2260 = vunpack.c.l.b16 %v2084
    %v2261 = vunpack.c.h.b16 %v2084
    %v2262 = vunpack.c.l.b16 %v2085
    %v2263 = vunpack.c.h.b16 %v2085
    %v2264 = vunpack.c.l.b16 %v2086
    %v2265 = vunpack.c.h.b16 %v2086
    %v2266 = vunpack.c.l.b16 %v2087
    %v2267 = vunpack.c.h.b16 %v2087
    %v2268 = vunpack.c.l.b16 %v2088
    %v2269 = vunpack.c.h.b16 %v2088
    %v2270 = vunpack.c.l.b16 %v2089
    %v2271 = vunpack.c.h.b16 %v2089
    %v2272 = vunpack.c.l.b16 %v2090
    %v2273 = vunpack.c.h.b16 %v2090
    %v2274 = vunpack.c.l.b16 %v2091
    %v2275 = vunpack.c.h.b16 %v2091
    %v2276 = vunpack.c.l.b16 %v2092
    %v2277 = vunpack.c.h.b16 %v2092
    %v2278 = vunpack.c.l.b16 %v2093
    %v2279 = vunpack.c.h.b16 %v2093
    %v2280 = vunpack.c.l.b16 %v2094
    %v2281 = vunpack.c.h.b16 %v2094
    %v2282 = vunpack.c.l.b16 %v2095
    %v2283 = vunpack.c.h.b16 %v2095
    %v2284 = vunpack.c.l.b16 %v2096
    %v2285 = vunpack.c.h.b16 %v2096
    %v2286 = vunpack.c.l.b16 %v2097
    %v2287 = vunpack.c.h.b16 %v2097
    %v2288 = vunpack.c.l.b16 %v2098
    %v2289 = vunpack.c.h.b16 %v2098
    %v2290 = vunpack.c.l.b16 %v2099
    %v2291 = vunpack.c.h.b16 %v2099
    %v2292 = vunpack.c.l.b16 %v2100
    %v2293 = vunpack.c.h.b16 %v2100
    %v2294 = vunpack.c.l.b16 %v2101
    %v2295 = vunpack.c.h.b16 %v2101
    %v2296 = vunpack.c.l.b16 %v2102
    %v2297 = vunpack.c.h.b16 %v2102
    %v2298 = vunpack.c.l.b16 %v2103
    %v2299 = vunpack.c.h.b16 %v2103
    %v2300 = vunpack.c.l.b16 %v2104
    %v2301 = vunpack.c.h.b16 %v2104
    %v2302 = vunpack.c.l.b16 %v2105
    %v2303 = vunpack.c.h.b16 %v2105
    %v2304 = vunpack.c.l.b16 %v2106
    %v2305 = vunpack.c.h.b16 %v2106
    %v2306 = vunpack.c.l.b16 %v2107
    %v2307 = vunpack.c.h.b16 %v2107
    %v2308 = vunpack.c.l.b16 %v2108
    %v2309 = vunpack.c.h.b16 %v2108
    %v2310 = vunpack.c.l.b16 %v2109
    %v2311 = vunpack.c.h.b16 %v2109
    %v2312 = vunpack.c.l.b16 %v2110
    %v2313 = vunpack.c.h.b16 %v2110
    %v2314 = vunpack.c.l.b16 %v2111
    %v2315 = vunpack.c.h.b16 %v2111
    %v2316 = vpack.c.b16 %v2190, %v2188
    %v2317 = vpack.c.b16 %v2191, %v2189
    %v2318 = vpack.c.b16 %v2194, %v2192
    %v2319 = vpack.c.b16 %v2195, %v2193
    %v2320 = vpack.c.b16 %v2198, %v2196
    %v2321 = vpack.c.b16 %v2199, %v2197
    %v2322 = vpack.c.b16 %v2202, %v2200
    %v2323 = vpack.c.b16 %v2203, %v2201
    %v2324 = vpack.c.b16 %v2206, %v2204
    %v2325 = vpack.c.b16 %v2207, %v2205
    %v2326 = vpack.c.b16 %v2210, %v2208
    %v2327 = vpack.c.b16 %v2211, %v2209
    %v2328 = vpack.c.b16 %v2214, %v2212
    %v2329 = vpack.c.b16 %v2215, %v2213
    %v2330 = vpack.c.b16 %v2218, %v2216
    %v2331 = vpack.c.b16 %v2219, %v2217
    %v2332 = vpack.c.b16 %v2222, %v2220
    %v2333 = vpack.c.b16 %v2223, %v2221
    %v2334 = vpack.c.b16 %v2226, %v2224
    %v2335 = vpack.c.b16 %v2227, %v2225
    %v2336 = vpack.c.b16 %v2230, %v2228
    %v2337 = vpack.c.b16 %v2231, %v2229
    %v2338 = vpack.c.b16 %v2234, %v2232
    %v2339 = vpack.c.b16 %v2235, %v2233
    %v2340 = vpack.c.b16 %v2238, %v2236
    %v2341 = vpack.c.b16 %v2239, %v2237
    %v2342 = vpack.c.b16 %v2242, %v2240
    %v2343 = vpack.c.b16 %v2243, %v2241
    %v2344 = vpack.c.b16 %v2246, %v2244
    %v2345 = vpack.c.b16 %v2247, %v2245
    %v2346 = vpack.c.b16 %v2250, %v2248
    %v2347 = vpack.c.b16 %v2251, %v2249
    %v2348 = vpack.c.b16 %v2254, %v2252
    %v2349 = vpack.c.b16 %v2255, %v2253
    %v2350 = vpack.c.b16 %v2258, %v2256
    %v2351 = vpack.c.b16 %v2259, %v2257
    %v2352 = vpack.c.b16 %v2262, %v2260
    %v2353 = vpack.c.b16 %v2263, %v2261
    %v2354 = vpack.c.b16 %v2266, %v2264
    %v2355 = vpack.c.b16 %v2267, %v2265
    %v2356 = vpack.c.b16 %v2270, %v2268
    %v2357 = vpack.c.b16 %v2271, %v2269
    %v2358 = vpack.c.b16 %v2274, %v2272
    %v2359 = vpack.c.b16 %v2275, %v2273
    %v2360 = vpack.c.b16 %v2278, %v2276
    %v2361 = vpack.c.b16 %v2279, %v2277
    %v2362 = vpack.c.b16 %v2282, %v2280
    %v2363 = vpack.c.b16 %v2283, %v2281
    %v2364 = vpack.c.b16 %v2286, %v2284
    %v2365 = vpack.c.b16 %v2287, %v2285
    %v2366 = vpack.c.b16 %v2290, %v2288
    %v2367 = vpack.c.b16 %v2291, %v2289
    %v2368 = vpack.c.b16 %v2294, %v2292
    %v2369 = vpack.c.b16 %v2295, %v2293
    %v2370 = vpack.c.b16 %v2298, %v2296
    %v2371 = vpack.c.b16 %v2299, %v2297
    %v2372 = vpack.c.b16 %v2302, %v2300
    %v2373 = vpack.c.b16 %v2303, %v2301
    %v2374 = vpack.c.b16 %v2306, %v2304
    %v2375 = vpack.c.b16 %v2307, %v2305
    %v2376 = vpack.c.b16 %v2310, %v2308
    %v2377 = vpack.c.b16 %v2311, %v2309
    %v2378 = vpack.c.b16 %v2314, %v2312
    %v2379 = vpack.c.b16 %v2315, %v2313
    %2444 = vmatprep.subr.bf16.mxu0 %v2331
    %2445 = vmatpush1.bf16.msra.mxu0 %v2330
    %2446 = vmatprep.subr.bf16.mxu0 %v2329
    %2447 = vmatpush1.bf16.msra.mxu0 %v2328
    %2448 = vmatprep.subr.bf16.mxu0 %v2327
    %2449 = vmatpush1.bf16.msra.mxu0 %v2326
    %2450 = vmatprep.subr.bf16.mxu0 %v2325
    %2451 = vmatpush1.bf16.msra.mxu0 %v2324
    %2452 = vmatprep.subr.bf16.mxu0 %v2323
    %2453 = vmatpush1.bf16.msra.mxu0 %v2322
    %2454 = vmatprep.subr.bf16.mxu0 %v2321
    %2455 = vmatpush1.bf16.msra.mxu0 %v2320
    %2456 = vmatprep.subr.bf16.mxu0 %v2319
    %2457 = vmatpush1.bf16.msra.mxu0 %v2318
    %2458 = vmatprep.subr.bf16.mxu0 %v2317
    %2459 = vmatpush1.bf16.msra.mxu0 %v2316
    %2460 = vmatprep.subr.bf16.mxu0 %v2347
    %2461 = vmatpush2.bf16.msra.mxu0 %v2346
    %2462 = vmatprep.subr.bf16.mxu0 %v2345
    %2463 = vmatpush2.bf16.msra.mxu0 %v2344
    %2464 = vmatprep.subr.bf16.mxu0 %v2343
    %2465 = vmatpush2.bf16.msra.mxu0 %v2342
    %2466 = vmatprep.subr.bf16.mxu0 %v2341
    %2467 = vmatpush2.bf16.msra.mxu0 %v2340
    %2468 = vmatprep.subr.bf16.mxu0 %v2339
    %2469 = vmatpush2.bf16.msra.mxu0 %v2338
    %2470 = vmatprep.subr.bf16.mxu0 %v2337
    %2471 = vmatpush2.bf16.msra.mxu0 %v2336
    %2472 = vmatprep.subr.bf16.mxu0 %v2335
    %2473 = vmatpush2.bf16.msra.mxu0 %v2334
    %2474 = vmatprep.subr.bf16.mxu0 %v2333
    %2475 = vmatpush2.bf16.msra.mxu0 %v2332
    %2476 = vmatprep.mubr.bf16.mxu0 %v2045
    %2477 = vmatmul.mubr.bf16.gmra.mxu0 %v2044
    %v2478 = vpop.f32.mrf.mxu0
    %v2479 = vadd.f32 %v2117, %v2478
    %v2480 = vpop.f32.mrf.mxu0
    %v2481 = vadd.f32 %v2121, %v2480
    %v2482 = vpop.f32.mrf.mxu0
    %v2483 = vadd.f32 %v2117, %v2482
    %v2484 = vpop.f32.mrf.mxu0
    %v2485 = vadd.f32 %v2121, %v2484
    %2486 = vdwg.mxu0
    %2487 = vmatprep.subr.bf16.mxu0 %v2363
    %2488 = vmatpush1.bf16.msra.mxu0 %v2362
    %2489 = vmatprep.subr.bf16.mxu0 %v2361
    %2490 = vmatpush1.bf16.msra.mxu0 %v2360
    %2491 = vmatprep.subr.bf16.mxu0 %v2359
    %2492 = vmatpush1.bf16.msra.mxu0 %v2358
    %2493 = vmatprep.subr.bf16.mxu0 %v2357
    %2494 = vmatpush1.bf16.msra.mxu0 %v2356
    %2495 = vmatprep.subr.bf16.mxu0 %v2355
    %2496 = vmatpush1.bf16.msra.mxu0 %v2354
    %2497 = vmatprep.subr.bf16.mxu0 %v2353
    %2498 = vmatpush1.bf16.msra.mxu0 %v2352
    %2499 = vmatprep.subr.bf16.mxu0 %v2351
    %2500 = vmatpush1.bf16.msra.mxu0 %v2350
    %2501 = vmatprep.subr.bf16.mxu0 %v2349
    %2502 = vmatpush1.bf16.msra.mxu0 %v2348
    %2503 = vmatprep.subr.bf16.mxu0 %v2379
    %2504 = vmatpush2.bf16.msra.mxu0 %v2378
    %2505 = vmatprep.subr.bf16.mxu0 %v2377
    %2506 = vmatpush2.bf16.msra.mxu0 %v2376
    %2507 = vmatprep.subr.bf16.mxu0 %v2375
    %2508 = vmatpush2.bf16.msra.mxu0 %v2374
    %2509 = vmatprep.subr.bf16.mxu0 %v2373
    %2510 = vmatpush2.bf16.msra.mxu0 %v2372
    %2511 = vmatprep.subr.bf16.mxu0 %v2371
    %2512 = vmatpush2.bf16.msra.mxu0 %v2370
    %2513 = vmatprep.subr.bf16.mxu0 %v2369
    %2514 = vmatpush2.bf16.msra.mxu0 %v2368
    %2515 = vmatprep.subr.bf16.mxu0 %v2367
    %2516 = vmatpush2.bf16.msra.mxu0 %v2366
    %2517 = vmatprep.subr.bf16.mxu0 %v2365
    %2518 = vmatpush2.bf16.msra.mxu0 %v2364
    %2519 = vmatprep.mubr.bf16.mxu0 %v2047
    %2520 = vmatmul.mubr.bf16.gmra.mxu0 %v2046
    %v2521 = vpop.f32.mrf.mxu0
    %v2522 = vadd.f32 %v2479, %v2521
    %v2523 = vpop.f32.mrf.mxu0
    %v2524 = vadd.f32 %v2481, %v2523
    %v2525 = vpop.f32.mrf.mxu0
    %v2526 = vadd.f32 %v2483, %v2525
    %v2527 = vpop.f32.mrf.mxu0
    %v2528 = vadd.f32 %v2485, %v2527
    %2529 = vdwg.mxu0
    %vm2530 = vcmp.ge.f32.partialorder %v2522, 0.0
    %vm2531 = vcmp.ge.f32.partialorder %v2524, 0.0
    %vm2532 = vcmp.ge.f32.partialorder %v2526, 0.0
    %vm2533 = vcmp.ge.f32.partialorder %v2528, 0.0
    %v2534 = vmul.f32 %v2522, 0.22916667
    %v2535 = vmul.f32 %v2524, 0.22916667
    %v2536 = vmul.f32 %v2526, 0.22916667
    %v2537 = vmul.f32 %v2528, 0.22916667
    %v2538 = vsel %vm2530, %v2522, %v2534
    %v2539 = vsel %vm2531, %v2524, %v2535
    %v2540 = vsel %vm2532, %v2526, %v2536
    %v2541 = vsel %vm2533, %v2528, %v2537
    %v2542 = vpack.c.bf16 %v2540, %v2538
    %v2543 = vpack.c.bf16 %v2541, %v2539
    %v2544 = vld [vmem:[#allocation10] sm:$0xf]
    %v2545 = vld [vmem:[#allocation10 + $0x4] sm:$0xf]
    %v2546 = vld [vmem:[#allocation10 + $0x8] sm:$0xf]
    %v2547 = vld [vmem:[#allocation10 + $0xc] sm:$0xf]
    %v2548 = vld [vmem:[#allocation10 + $0x10] sm:$0xf]
    %v2549 = vld [vmem:[#allocation10 + $0x14] sm:$0xf]
    %v2550 = vld [vmem:[#allocation10 + $0x18] sm:$0xf]
    %v2551 = vld [vmem:[#allocation10 + $0x1c] sm:$0xf]
    %v2552 = vld [vmem:[#allocation10 + $0x20] sm:$0xf]
    %v2553 = vld [vmem:[#allocation10 + $0x24] sm:$0xf]
    %v2554 = vld [vmem:[#allocation10 + $0x28] sm:$0xf]
    %v2555 = vld [vmem:[#allocation10 + $0x2c] sm:$0xf]
    %v2556 = vld [vmem:[#allocation10 + $0x30] sm:$0xf]
    %v2557 = vld [vmem:[#allocation10 + $0x34] sm:$0xf]
    %v2558 = vld [vmem:[#allocation10 + $0x38] sm:$0xf]
    %v2559 = vld [vmem:[#allocation10 + $0x3c] sm:$0xf]
    %v2560 = vld [vmem:[#allocation10 + $0x40] sm:$0xf]
    %v2561 = vld [vmem:[#allocation10 + $0x44] sm:$0xf]
    %v2562 = vld [vmem:[#allocation10 + $0x48] sm:$0xf]
    %v2563 = vld [vmem:[#allocation10 + $0x4c] sm:$0xf]
    %v2564 = vld [vmem:[#allocation10 + $0x50] sm:$0xf]
    %v2565 = vld [vmem:[#allocation10 + $0x54] sm:$0xf]
    %v2566 = vld [vmem:[#allocation10 + $0x58] sm:$0xf]
    %v2567 = vld [vmem:[#allocation10 + $0x5c] sm:$0xf]
    %v2568 = vld [vmem:[#allocation10 + $0x60] sm:$0xf]
    %v2569 = vld [vmem:[#allocation10 + $0x64] sm:$0xf]
    %v2570 = vld [vmem:[#allocation10 + $0x68] sm:$0xf]
    %v2571 = vld [vmem:[#allocation10 + $0x6c] sm:$0xf]
    %v2572 = vld [vmem:[#allocation10 + $0x70] sm:$0xf]
    %v2573 = vld [vmem:[#allocation10 + $0x74] sm:$0xf]
    %v2574 = vld [vmem:[#allocation10 + $0x78] sm:$0xf]
    %v2575 = vld [vmem:[#allocation10 + $0x7c] sm:$0xf]
    %v2576 = vld [vmem:[%s6] sm:$0x1]
    %v2578 = vlaneseq
    %v2579 = vshrl.u32 %v2578, 7
    %v2580 = vsub.s32 0, %v2579
    %v2581 = vrot.slane %v2576, %v2580
    %v2615 = vunpack.c.l.b16 %v2544
    %v2616 = vunpack.c.l.b16 %v2545
    %v2617 = vunpack.c.l.b16 %v2546
    %v2618 = vunpack.c.l.b16 %v2547
    %v2619 = vunpack.c.l.b16 %v2548
    %v2620 = vunpack.c.l.b16 %v2549
    %v2621 = vunpack.c.l.b16 %v2550
    %v2622 = vunpack.c.l.b16 %v2551
    %v2623 = vunpack.c.l.b16 %v2552
    %v2624 = vunpack.c.l.b16 %v2553
    %v2625 = vunpack.c.l.b16 %v2554
    %v2626 = vunpack.c.l.b16 %v2555
    %v2627 = vunpack.c.l.b16 %v2556
    %v2628 = vunpack.c.l.b16 %v2557
    %v2629 = vunpack.c.l.b16 %v2558
    %v2630 = vunpack.c.l.b16 %v2559
    %v2631 = vunpack.c.l.b16 %v2560
    %v2632 = vunpack.c.l.b16 %v2561
    %v2633 = vunpack.c.l.b16 %v2562
    %v2634 = vunpack.c.l.b16 %v2563
    %v2635 = vunpack.c.l.b16 %v2564
    %v2636 = vunpack.c.l.b16 %v2565
    %v2637 = vunpack.c.l.b16 %v2566
    %v2638 = vunpack.c.l.b16 %v2567
    %v2639 = vunpack.c.l.b16 %v2568
    %v2640 = vunpack.c.l.b16 %v2569
    %v2641 = vunpack.c.l.b16 %v2570
    %v2642 = vunpack.c.l.b16 %v2571
    %v2643 = vunpack.c.l.b16 %v2572
    %v2644 = vunpack.c.l.b16 %v2573
    %v2645 = vunpack.c.l.b16 %v2574
    %v2646 = vunpack.c.l.b16 %v2575
    %v2647 = vpack.c.b16 %v2616, %v2615
    %v2648 = vpack.c.b16 %v2618, %v2617
    %v2649 = vpack.c.b16 %v2620, %v2619
    %v2650 = vpack.c.b16 %v2622, %v2621
    %v2651 = vpack.c.b16 %v2624, %v2623
    %v2652 = vpack.c.b16 %v2626, %v2625
    %v2653 = vpack.c.b16 %v2628, %v2627
    %v2654 = vpack.c.b16 %v2630, %v2629
    %v2655 = vpack.c.b16 %v2632, %v2631
    %v2656 = vpack.c.b16 %v2634, %v2633
    %v2657 = vpack.c.b16 %v2636, %v2635
    %v2658 = vpack.c.b16 %v2638, %v2637
    %v2659 = vpack.c.b16 %v2640, %v2639
    %v2660 = vpack.c.b16 %v2642, %v2641
    %v2661 = vpack.c.b16 %v2644, %v2643
    %v2662 = vpack.c.b16 %v2646, %v2645
    %2679 = vmatprep.subr.bf16.mxu0 0
    %2680 = vmatpush1.bf16.msra.mxu0 %v2654
    %2681 = vmatprep.subr.bf16.mxu0 0
    %2682 = vmatpush1.bf16.msra.mxu0 %v2653
    %2683 = vmatprep.subr.bf16.mxu0 0
    %2684 = vmatpush1.bf16.msra.mxu0 %v2652
    %2685 = vmatprep.subr.bf16.mxu0 0
    %2686 = vmatpush1.bf16.msra.mxu0 %v2651
    %2687 = vmatprep.subr.bf16.mxu0 0
    %2688 = vmatpush1.bf16.msra.mxu0 %v2650
    %2689 = vmatprep.subr.bf16.mxu0 0
    %2690 = vmatpush1.bf16.msra.mxu0 %v2649
    %2691 = vmatprep.subr.bf16.mxu0 0
    %2692 = vmatpush1.bf16.msra.mxu0 %v2648
    %2693 = vmatprep.subr.bf16.mxu0 0
    %2694 = vmatpush1.bf16.msra.mxu0 %v2647
    %2695 = vmatprep.subr.bf16.mxu0 0
    %2696 = vmatpush2.bf16.msra.mxu0 %v2662
    %2697 = vmatprep.subr.bf16.mxu0 0
    %2698 = vmatpush2.bf16.msra.mxu0 %v2661
    %2699 = vmatprep.subr.bf16.mxu0 0
    %2700 = vmatpush2.bf16.msra.mxu0 %v2660
    %2701 = vmatprep.subr.bf16.mxu0 0
    %2702 = vmatpush2.bf16.msra.mxu0 %v2659
    %2703 = vmatprep.subr.bf16.mxu0 0
    %2704 = vmatpush2.bf16.msra.mxu0 %v2658
    %2705 = vmatprep.subr.bf16.mxu0 0
    %2706 = vmatpush2.bf16.msra.mxu0 %v2657
    %2707 = vmatprep.subr.bf16.mxu0 0
    %2708 = vmatpush2.bf16.msra.mxu0 %v2656
    %2709 = vmatprep.subr.bf16.mxu0 0
    %2710 = vmatpush2.bf16.msra.mxu0 %v2655
    %2711 = vmatprep.mubr.bf16.mxu0 %v2543
    %2712 = vmatmul.mubr.bf16.gmra.mxu0 %v2542
    %v2713 = vpop.f32.mrf.mxu0
    %v2714 = vadd.f32 %v2581, %v2713
    %v2715 = vpop.f32.mrf.mxu0
    %v2716 = vpop.f32.mrf.mxu0
    %v2717 = vadd.f32 %v2581, %v2716
    %v2718 = vpop.f32.mrf.mxu0
    %2719 = vdwg.mxu0
    %2720 = vst [vmem:[#allocation11] sm:$0xff] %v2714
    %2721 = vst [vmem:[#allocation11 + $0x8] sm:$0xff] %v2717
    // Predicated region
    $region50: #{tpu_custom_call.1} parent=1 // pred_check
      _
    $region51: #{tpu_custom_call.1} parent=1 // pred_check_branch
      %2723 = sbr.rel (0) target = $region53
    $region52: #{tpu_custom_call.1} parent=1 // pred_region
      %s2725 = ssub.s32 256, 256
      %2726 = vsyncadd [#allocation4], %s2725
      %s2727 = sshll.u32 [#allocation11], 4
      %s2728 = int_to_ptr.vmem [resolvable:$true] %s2727
      %2733 = dma.vmem_to_hbm [thread:$0]  %s2728, 256, %s7, [#allocation4], 128, 128, 8
    $region53: #{tpu_custom_call.1} parent=1 // pred_fallthru
      _
    // Predicated region
    $region54: #{tpu_custom_call.1} parent=1 // pred_check
      _
    $region55: #{tpu_custom_call.1} parent=1 // pred_check_branch
      %2735 = sbr.rel (0) target = $region57
    $region56: #{tpu_custom_call.1} parent=1 // pred_region
      %2736 = dma.done [#allocation4], 256
    $region57: #{tpu_custom_call.1} parent=1 // pred_fallthru
      _
    %2737 = vsyncpa [#allocation3], 1
    %2738 = vsyncpa [#allocation6], 1
    %2739 = vsyncpa [#allocation9], 1
    %2740 = vsyncpa [#allocation4], 1

</llo_original>
